<compile_context>
chip_gen: v5e
topology: v5e:2x2
jax: 0.10.0
libtpu: 0.0.40
codegen_flags: <defaults>
</compile_context>

<pallas_src>
import functools
import numpy as np

import jax
import jax.numpy as jnp
from jax import lax
from jax.experimental import pallas as pl
from jax.experimental.pallas import tpu as pltpu

_VMEM = pl.BlockSpec(memory_space=pltpu.MemorySpace.VMEM)


# ------------------------------ fused kernel -------------------------------- #

def _bn_train(x, gamma, beta, eps=1e-5):
    """BatchNorm1d forward with batch statistics (training mode), biased var."""
    mean = jnp.mean(x, axis=0, keepdims=True)
    var = jnp.mean(jnp.square(x - mean), axis=0, keepdims=True)
    return (x - mean) * lax.rsqrt(var + eps) * gamma + beta


def _fused_forward_kernel(
    x_flat_ref,                        # (C*2*L*N, D) time-major flat, [cond1 ; cond2] stacked
    wih1_ref, whh1_ref, b1_ref,        # (D,4H) (H,4H) (1,4H)
    cond_w_ref, cond_b_ref,            # (H,hid) (1,hid)
    bn1_g_ref, bn1_b_ref,              # (1,hid)
    samples_ref, samp_w_ref, samp_b_ref, mask_ref,   # (N,1000) (1000,hid) (1,hid) (N,1) -- last level only
    ops_last_ref, extra_last_ref,      # (N,15) (N,108)
    w2_ops_ref, w2_extra_ref, w2_cond_ref, w2_samp_ref, b2_ref,  # lstm2 W_ih split; (1,4H)
    bn2_g_ref, bn2_b_ref,              # (1,H)
    head2_w_ref, head2_b_ref,          # (H,2*hid) (1,2*hid)
    bn3_g_ref, bn3_b_ref,              # (1,2*hid)  (bn3 gamma/beta tiled twice)
    head3_w_ref, head3_b_ref,          # (2*hid,2*hid) block-diag, (1,2*hid)
    out_w_ref, out_b_ref,              # (2*hid,2) block-diag, (1,2)
    o_ref,                             # (batch_size, 2)
    *, L, N, C, batch_size,
):
    H = whh1_ref.shape[0]
    B2 = 2 * L * N                     # condition1s and condition2s stacked on batch

    # ---- lstm1 over both condition sets, zero initial state ----------------
    # Hoist the input projection of ALL time steps into one matmul; add the
    # (folded) bias once via a single broadcast.
    xg_all = (jnp.dot(x_flat_ref[...], wih1_ref[...],
                      preferred_element_type=jnp.float32)
              + b1_ref[...])                                   # (C*B2, 4H)
    whh1 = whh1_ref[...]

    def lstm_step(gates, c_prev):
        i = jax.nn.sigmoid(gates[:, 0 * H:1 * H])
        f = jax.nn.sigmoid(gates[:, 1 * H:2 * H])
        g = jnp.tanh(gates[:, 2 * H:3 * H])
        o = jax.nn.sigmoid(gates[:, 3 * H:4 * H])
        c = f * c_prev + i * g
        return o * jnp.tanh(c), c

    # t = 0: h0 = c0 = 0  =>  skip the h @ W_hh matmul and the f*c term.
    g0 = xg_all[0:B2, :]
    i0 = jax.nn.sigmoid(g0[:, 0 * H:1 * H])
    gg0 = jnp.tanh(g0[:, 2 * H:3 * H])
    o0 = jax.nn.sigmoid(g0[:, 3 * H:4 * H])
    c = i0 * gg0
    h = o0 * jnp.tanh(c)
    for t in range(1, C):                                      # unrolled (C is static)
        gates = xg_all[t * B2:(t + 1) * B2, :] + jnp.dot(
            h, whh1, preferred_element_type=jnp.float32)       # (B2, 4H)
        h, c = lstm_step(gates, c)                             # (B2, H) final hidden state

    # ---- condition_mlp + relu on the stacked hidden states, average, bn1 ----
    lo = jnp.maximum(
        jnp.dot(h, cond_w_ref[...], preferred_element_type=jnp.float32)
        + cond_b_ref[...], 0.0)                                # (2*L*N, hid)
    last_output = (lo[:L * N] + lo[L * N:]) * 0.5              # (L*N, hid)
    cond_emb = _bn_train(last_output, bn1_g_ref[...], bn1_b_ref[...])

    # ---- sample_mlp + relu, masked (last level only -- rest is dead) --------
    samp_last = jnp.maximum(
        jnp.dot(samples_ref[...], samp_w_ref[...], preferred_element_type=jnp.float32)
        + samp_b_ref[...], 0.0) * mask_ref[...]                # (N, hid)

    # ---- lstm2: T=1, h0=c0=0  =>  gates = x @ W_ih + b  (h@W_hh term is 0) ---
    # Only the last level of the concat feeds lstm2; concat-then-matmul is
    # replaced by a sum of per-block matmuls (ops | extra | cond_emb | samp).
    r0 = (L - 1) * N
    gates2 = (jnp.dot(ops_last_ref[...], w2_ops_ref[...], preferred_element_type=jnp.float32)
              + jnp.dot(extra_last_ref[...], w2_extra_ref[...], preferred_element_type=jnp.float32)
              + jnp.dot(cond_emb[r0:r0 + N], w2_cond_ref[...], preferred_element_type=jnp.float32)
              + jnp.dot(samp_last, w2_samp_ref[...], preferred_element_type=jnp.float32)
              + b2_ref[...])                                   # (N, 4H)
    i2 = jax.nn.sigmoid(gates2[:, 0 * H:1 * H])
    g2 = jnp.tanh(gates2[:, 2 * H:3 * H])
    o2 = jax.nn.sigmoid(gates2[:, 3 * H:4 * H])
    hid2 = o2 * jnp.tanh(i2 * g2)                              # f*c0 == 0; (N, H)

    # ---- slice to batch_size, batch_norm2 ----------------------------------
    out = _bn_train(hid2[:batch_size], bn2_g_ref[...], bn2_b_ref[...])

    # ---- fused task heads: [task1 | task2] along the feature axis -----------
    t = jnp.maximum(
        jnp.dot(out, head2_w_ref[...], preferred_element_type=jnp.float32)
        + head2_b_ref[...], 0.0)                               # (B, 2*hid)
    t = _bn_train(t, bn3_g_ref[...], bn3_b_ref[...])           # shared bn3 params, per-column stats
    t = jnp.maximum(
        jnp.dot(t, head3_w_ref[...], preferred_element_type=jnp.float32)
        + head3_b_ref[...], 0.0)                               # (B, 2*hid)
    y = jax.nn.sigmoid(
        jnp.dot(t, out_w_ref[...], preferred_element_type=jnp.float32)
        + out_b_ref[...])                                      # (B, 2)
    o_ref[...] = y


# ------------------------------ parameters ---------------------------------- #

def _uniform(key, shape, fan_in):
    k = 1.0 / np.sqrt(fan_in)
    return jax.random.uniform(key, shape, jnp.float32, -k, k)


def init_params(input_dim, hidden_dim, hid_dim, key):
    lstm2_in = 15 + 108 + 2 * hid_dim
    ks = iter(jax.random.split(key, 32))
    p = {}
    # lstm1 (shared for condition1s / condition2s)
    p["lstm1_wih"] = _uniform(next(ks), (input_dim, 4 * hidden_dim), hidden_dim)
    p["lstm1_whh"] = _uniform(next(ks), (hidden_dim, 4 * hidden_dim), hidden_dim)
    p["lstm1_b"] = _uniform(next(ks), (4 * hidden_dim,), hidden_dim)   # b_ih + b_hh folded
    # condition_mlp / sample_mlp
    p["cond_w"] = _uniform(next(ks), (hidden_dim, hid_dim), hidden_dim)
    p["cond_b"] = _uniform(next(ks), (hid_dim,), hidden_dim)
    p["samp_w"] = _uniform(next(ks), (1000, hid_dim), 1000)
    p["samp_b"] = _uniform(next(ks), (hid_dim,), 1000)
    # lstm2 (W_hh is unused in the forward here: T=1 with zero initial state)
    p["lstm2_wih"] = _uniform(next(ks), (lstm2_in, 4 * hidden_dim), hidden_dim)
    p["lstm2_b"] = _uniform(next(ks), (4 * hidden_dim,), hidden_dim)
    # batch norms (PyTorch default affine init: gamma=1, beta=0)
    p["bn1_g"], p["bn1_b"] = jnp.ones((hid_dim,)), jnp.zeros((hid_dim,))
    p["bn2_g"], p["bn2_b"] = jnp.ones((hidden_dim,)), jnp.zeros((hidden_dim,))
    p["bn3_g"], p["bn3_b"] = jnp.ones((hid_dim,)), jnp.zeros((hid_dim,))
    # task heads
    p["h2t1_w"] = _uniform(next(ks), (hidden_dim, hid_dim), hidden_dim)
    p["h2t1_b"] = _uniform(next(ks), (hid_dim,), hidden_dim)
    p["h2t2_w"] = _uniform(next(ks), (hidden_dim, hid_dim), hidden_dim)
    p["h2t2_b"] = _uniform(next(ks), (hid_dim,), hidden_dim)
    p["h3t1_w"] = _uniform(next(ks), (hid_dim, hid_dim), hid_dim)
    p["h3t1_b"] = _uniform(next(ks), (hid_dim,), hid_dim)
    p["h3t2_w"] = _uniform(next(ks), (hid_dim, hid_dim), hid_dim)
    p["h3t2_b"] = _uniform(next(ks), (hid_dim,), hid_dim)
    p["o1_w"] = _uniform(next(ks), (hid_dim, 1), hid_dim)
    p["o1_b"] = _uniform(next(ks), (1,), hid_dim)
    p["o2_w"] = _uniform(next(ks), (hid_dim, 1), hid_dim)
    p["o2_b"] = _uniform(next(ks), (1,), hid_dim)
    return p


def fuse_params(p, hid_dim):
    """Build the fused-kernel parameter set (done once, outside forward)."""
    hid = hid_dim
    Z = jnp.zeros((hid, hid), jnp.float32)
    z1 = jnp.zeros((hid, 1), jnp.float32)
    return {
        "wih1": p["lstm1_wih"], "whh1": p["lstm1_whh"], "b1": p["lstm1_b"].reshape(1, -1),
        "cond_w": p["cond_w"], "cond_b": p["cond_b"].reshape(1, -1),
        "bn1_g": p["bn1_g"].reshape(1, -1), "bn1_b": p["bn1_b"].reshape(1, -1),
        "samp_w": p["samp_w"], "samp_b": p["samp_b"].reshape(1, -1),
        # lstm2 W_ih split by input blocks: ops(15) | extra(108) | cond(hid) | samp(hid)
        "w2_ops": p["lstm2_wih"][:15],
        "w2_extra": p["lstm2_wih"][15:15 + 108],
        "w2_cond": p["lstm2_wih"][15 + 108:15 + 108 + hid],
        "w2_samp": p["lstm2_wih"][15 + 108 + hid:],
        "b2": p["lstm2_b"].reshape(1, -1),
        "bn2_g": p["bn2_g"].reshape(1, -1), "bn2_b": p["bn2_b"].reshape(1, -1),
        # fused task heads: task1 | task2 on the feature axis
        "head2_w": jnp.concatenate([p["h2t1_w"], p["h2t2_w"]], axis=1),
        "head2_b": jnp.concatenate([p["h2t1_b"], p["h2t2_b"]]).reshape(1, -1),
        "bn3_g": jnp.concatenate([p["bn3_g"], p["bn3_g"]]).reshape(1, -1),
        "bn3_b": jnp.concatenate([p["bn3_b"], p["bn3_b"]]).reshape(1, -1),
        "head3_w": jnp.block([[p["h3t1_w"], Z], [Z, p["h3t2_w"]]]),
        "head3_b": jnp.concatenate([p["h3t1_b"], p["h3t2_b"]]).reshape(1, -1),
        "out_w": jnp.block([[p["o1_w"], z1], [z1, p["o2_w"]]]),
        "out_b": jnp.concatenate([p["o1_b"], p["o2_b"]]).reshape(1, -1),
    }


# ------------------------------ forward pass --------------------------------- #

@functools.partial(jax.jit, static_argnames=("batch_size",))
def representation_forward(fused, operators, extra_infos, condition1s, condition2s,
                           samples, condition_masks, mapping, batch_size):
    del mapping  # TODO(synk): the reference's reversed `mapping` index_select loop never
    #              writes its results back into hid/cid, so it cannot affect the outputs.
    L, N, C, D = condition1s.shape

    # Stack condition1s/condition2s on the batch axis and flatten time-major so
    # the kernel can do one big x @ W_ih matmul and take contiguous per-step slices.
    x12 = jnp.concatenate(
        [condition1s.reshape(L * N, C, D), condition2s.reshape(L * N, C, D)], axis=0)
    x_flat = jnp.transpose(x12, (1, 0, 2)).reshape(C * 2 * L * N, D).astype(jnp.float32)

    # Only the last level of samples / masks / operators / extra_infos reaches
    # the outputs -> send only that slice to the kernel (smaller DMA + matmul).
    samples_last = samples[L - 1].astype(jnp.float32)          # (N, 1000)
    mask_last = condition_masks[L - 1].astype(jnp.float32)     # (N, 1)
    ops_last = operators[L - 1].astype(jnp.float32)            # (N, 15)
    extra_last = extra_infos[L - 1].astype(jnp.float32)        # (N, 108)

    y = pl.pallas_call(
        functools.partial(_fused_forward_kernel, L=L, N=N, C=C, batch_size=batch_size),
        out_shape=jax.ShapeDtypeStruct((batch_size, 2), jnp.float32),
        in_specs=[_VMEM] * 29,
        out_specs=_VMEM,
    )(
        x_flat,
        fused["wih1"], fused["whh1"], fused["b1"],
        fused["cond_w"], fused["cond_b"],
        fused["bn1_g"], fused["bn1_b"],
        samples_last, fused["samp_w"], fused["samp_b"], mask_last,
        ops_last, extra_last,
        fused["w2_ops"], fused["w2_extra"], fused["w2_cond"], fused["w2_samp"], fused["b2"],
        fused["bn2_g"], fused["bn2_b"],
        fused["head2_w"], fused["head2_b"],
        fused["bn3_g"], fused["bn3_b"],
        fused["head3_w"], fused["head3_b"],
        fused["out_w"], fused["out_b"],
    )
    return y[:, 0:1], y[:, 1:2]


# ---------------------------------- main ------------------------------------- #

if __name__ == "__main__":
    # Small shapes consistent with the module's forward pass.
    L, N, C = 2, 8, 3                 # num_level, num_node_per_level, conditions/node
    input_dim, hidden_dim, hid_dim = 13, 32, 32

    key = jax.random.PRNGKey(0)
    ks = jax.random.split(key, 8)
    # all-nonzero operator rows so the reference's batch_size scan counts every node
    operators = jnp.abs(jax.random.normal(ks[0], (L, N, 15), jnp.float32)) + 0.1
    extra_infos = jax.random.normal(ks[1], (L, N, 108), jnp.float32)
    condition1s = jax.random.normal(ks[2], (L, N, C, input_dim), jnp.float32)
    condition2s = jax.random.normal(ks[3], (L, N, C, input_dim), jnp.float32)
    samples = jax.random.normal(ks[4], (L, N, 1000), jnp.float32)
    condition_masks = (jax.random.uniform(ks[5], (L, N, 1)) > 0.3).astype(jnp.float32)
    mapping = jnp.zeros((L, N, 2), jnp.int32)   # only used by the dead loop in the reference

    # Host-side batch_size scan, exactly as the PyTorch reference does it.
    ops_np = np.asarray(operators)
    batch_size = 0
    for i in range(ops_np.shape[1]):
        if ops_np[0, i].sum() != 0:
            batch_size += 1
        else:
            break

    params = init_params(input_dim, hidden_dim, hid_dim, jax.random.PRNGKey(1234))
    fused = fuse_params(params, hid_dim)

    out_task1, out_task2 = representation_forward(
        fused, operators, extra_infos, condition1s, condition2s,
        samples, condition_masks, mapping, batch_size)
    jax.block_until_ready((out_task1, out_task2))

    assert out_task1.shape == (batch_size, 1) and out_task2.shape == (batch_size, 1)
    assert bool(jnp.all(jnp.isfinite(out_task1))) and bool(jnp.all(jnp.isfinite(out_task2)))
    print("KERNEL_OK")
</pallas_src>

<mosaic_0001>
module attributes {stable_mosaic.version = 11 : i64} {
  func.func @_fused_forward_kernel(%arg0: memref<96x13xf32, #tpu.memory_space<vmem>>, %arg1: memref<13x128xf32, #tpu.memory_space<vmem>>, %arg2: memref<32x128xf32, #tpu.memory_space<vmem>>, %arg3: memref<1x128xf32, #tpu.memory_space<vmem>>, %arg4: memref<32x32xf32, #tpu.memory_space<vmem>>, %arg5: memref<1x32xf32, #tpu.memory_space<vmem>>, %arg6: memref<1x32xf32, #tpu.memory_space<vmem>>, %arg7: memref<1x32xf32, #tpu.memory_space<vmem>>, %arg8: memref<8x1000xf32, #tpu.memory_space<vmem>>, %arg9: memref<1000x32xf32, #tpu.memory_space<vmem>>, %arg10: memref<1x32xf32, #tpu.memory_space<vmem>>, %arg11: memref<8x1xf32, #tpu.memory_space<vmem>>, %arg12: memref<8x15xf32, #tpu.memory_space<vmem>>, %arg13: memref<8x108xf32, #tpu.memory_space<vmem>>, %arg14: memref<15x128xf32, #tpu.memory_space<vmem>>, %arg15: memref<108x128xf32, #tpu.memory_space<vmem>>, %arg16: memref<32x128xf32, #tpu.memory_space<vmem>>, %arg17: memref<32x128xf32, #tpu.memory_space<vmem>>, %arg18: memref<1x128xf32, #tpu.memory_space<vmem>>, %arg19: memref<1x32xf32, #tpu.memory_space<vmem>>, %arg20: memref<1x32xf32, #tpu.memory_space<vmem>>, %arg21: memref<32x64xf32, #tpu.memory_space<vmem>>, %arg22: memref<1x64xf32, #tpu.memory_space<vmem>>, %arg23: memref<1x64xf32, #tpu.memory_space<vmem>>, %arg24: memref<1x64xf32, #tpu.memory_space<vmem>>, %arg25: memref<64x64xf32, #tpu.memory_space<vmem>>, %arg26: memref<1x64xf32, #tpu.memory_space<vmem>>, %arg27: memref<64x2xf32, #tpu.memory_space<vmem>>, %arg28: memref<1x2xf32, #tpu.memory_space<vmem>>, %arg29: memref<8x2xf32, #tpu.memory_space<vmem>>) attributes {dimension_semantics = [], scalar_prefetch = 0 : i64, scratch_operands = 0 : i64, tpu.core_type = #tpu.core_type<tc>} {
    %c0 = arith.constant 0 : index
    %c0_0 = arith.constant 0 : index
    %0 = vector.load %arg0[%c0, %c0_0] : memref<96x13xf32, #tpu.memory_space<vmem>>, vector<96x13xf32>
    %c0_1 = arith.constant 0 : index
    %c0_2 = arith.constant 0 : index
    %1 = vector.load %arg1[%c0_1, %c0_2] : memref<13x128xf32, #tpu.memory_space<vmem>>, vector<13x128xf32>
    %cst = arith.constant dense<0.000000e+00> : vector<96x128xf32>
    %2 = tpu.matmul %0, %1, %cst {dimension_numbers = #tpu.dot_dimension_numbers<[1], [0], [0], [1], [0, 0, 1, 1], [], []>} : vector<96x13xf32>, vector<13x128xf32>, vector<96x128xf32> -> vector<96x128xf32>
    %c0_3 = arith.constant 0 : index
    %c0_4 = arith.constant 0 : index
    %3 = vector.load %arg3[%c0_3, %c0_4] : memref<1x128xf32, #tpu.memory_space<vmem>>, vector<1x128xf32>
    %4 = vector.broadcast %3 : vector<1x128xf32> to vector<96x128xf32>
    %5 = arith.addf %2, %4 : vector<96x128xf32>
    %c0_5 = arith.constant 0 : index
    %c0_6 = arith.constant 0 : index
    %6 = vector.load %arg2[%c0_5, %c0_6] : memref<32x128xf32, #tpu.memory_space<vmem>>, vector<32x128xf32>
    %7 = vector.extract_strided_slice %5 {offsets = [0, 0], sizes = [32, 128], strides = [1, 1]} : vector<96x128xf32> to vector<32x128xf32>
    %8 = vector.extract_strided_slice %7 {offsets = [0, 0], sizes = [32, 32], strides = [1, 1]} : vector<32x128xf32> to vector<32x32xf32>
    %9 = arith.negf %8 : vector<32x32xf32>
    %10 = math.exp %9 : vector<32x32xf32>
    %cst_7 = arith.constant 1.000000e+00 : f32
    %11 = vector.broadcast %cst_7 : f32 to vector<32x32xf32>
    %12 = arith.addf %11, %10 : vector<32x32xf32>
    %13 = arith.divf %11, %12 : vector<32x32xf32>
    %14 = vector.extract_strided_slice %7 {offsets = [0, 64], sizes = [32, 32], strides = [1, 1]} : vector<32x128xf32> to vector<32x32xf32>
    %15 = math.tanh %14 : vector<32x32xf32>
    %16 = vector.extract_strided_slice %7 {offsets = [0, 96], sizes = [32, 32], strides = [1, 1]} : vector<32x128xf32> to vector<32x32xf32>
    %17 = arith.negf %16 : vector<32x32xf32>
    %18 = math.exp %17 : vector<32x32xf32>
    %cst_8 = arith.constant 1.000000e+00 : f32
    %19 = vector.broadcast %cst_8 : f32 to vector<32x32xf32>
    %20 = arith.addf %19, %18 : vector<32x32xf32>
    %21 = arith.divf %19, %20 : vector<32x32xf32>
    %22 = arith.mulf %13, %15 : vector<32x32xf32>
    %23 = math.tanh %22 : vector<32x32xf32>
    %24 = arith.mulf %21, %23 : vector<32x32xf32>
    %25 = vector.extract_strided_slice %5 {offsets = [32, 0], sizes = [32, 128], strides = [1, 1]} : vector<96x128xf32> to vector<32x128xf32>
    %cst_9 = arith.constant dense<0.000000e+00> : vector<32x128xf32>
    %26 = tpu.matmul %24, %6, %cst_9 {dimension_numbers = #tpu.dot_dimension_numbers<[1], [0], [0], [1], [0, 0, 1, 1], [], []>} : vector<32x32xf32>, vector<32x128xf32>, vector<32x128xf32> -> vector<32x128xf32>
    %27 = arith.addf %25, %26 : vector<32x128xf32>
    %28 = vector.extract_strided_slice %27 {offsets = [0, 0], sizes = [32, 32], strides = [1, 1]} : vector<32x128xf32> to vector<32x32xf32>
    %29 = arith.negf %28 : vector<32x32xf32>
    %30 = math.exp %29 : vector<32x32xf32>
    %cst_10 = arith.constant 1.000000e+00 : f32
    %31 = vector.broadcast %cst_10 : f32 to vector<32x32xf32>
    %32 = arith.addf %31, %30 : vector<32x32xf32>
    %33 = arith.divf %31, %32 : vector<32x32xf32>
    %34 = vector.extract_strided_slice %27 {offsets = [0, 32], sizes = [32, 32], strides = [1, 1]} : vector<32x128xf32> to vector<32x32xf32>
    %35 = arith.negf %34 : vector<32x32xf32>
    %36 = math.exp %35 : vector<32x32xf32>
    %cst_11 = arith.constant 1.000000e+00 : f32
    %37 = vector.broadcast %cst_11 : f32 to vector<32x32xf32>
    %38 = arith.addf %37, %36 : vector<32x32xf32>
    %39 = arith.divf %37, %38 : vector<32x32xf32>
    %40 = vector.extract_strided_slice %27 {offsets = [0, 64], sizes = [32, 32], strides = [1, 1]} : vector<32x128xf32> to vector<32x32xf32>
    %41 = math.tanh %40 : vector<32x32xf32>
    %42 = vector.extract_strided_slice %27 {offsets = [0, 96], sizes = [32, 32], strides = [1, 1]} : vector<32x128xf32> to vector<32x32xf32>
    %43 = arith.negf %42 : vector<32x32xf32>
    %44 = math.exp %43 : vector<32x32xf32>
    %cst_12 = arith.constant 1.000000e+00 : f32
    %45 = vector.broadcast %cst_12 : f32 to vector<32x32xf32>
    %46 = arith.addf %45, %44 : vector<32x32xf32>
    %47 = arith.divf %45, %46 : vector<32x32xf32>
    %48 = arith.mulf %39, %22 : vector<32x32xf32>
    %49 = arith.mulf %33, %41 : vector<32x32xf32>
    %50 = arith.addf %48, %49 : vector<32x32xf32>
    %51 = math.tanh %50 : vector<32x32xf32>
    %52 = arith.mulf %47, %51 : vector<32x32xf32>
    %53 = vector.extract_strided_slice %5 {offsets = [64, 0], sizes = [32, 128], strides = [1, 1]} : vector<96x128xf32> to vector<32x128xf32>
    %cst_13 = arith.constant dense<0.000000e+00> : vector<32x128xf32>
    %54 = tpu.matmul %52, %6, %cst_13 {dimension_numbers = #tpu.dot_dimension_numbers<[1], [0], [0], [1], [0, 0, 1, 1], [], []>} : vector<32x32xf32>, vector<32x128xf32>, vector<32x128xf32> -> vector<32x128xf32>
    %55 = arith.addf %53, %54 : vector<32x128xf32>
    %56 = vector.extract_strided_slice %55 {offsets = [0, 0], sizes = [32, 32], strides = [1, 1]} : vector<32x128xf32> to vector<32x32xf32>
    %57 = arith.negf %56 : vector<32x32xf32>
    %58 = math.exp %57 : vector<32x32xf32>
    %cst_14 = arith.constant 1.000000e+00 : f32
    %59 = vector.broadcast %cst_14 : f32 to vector<32x32xf32>
    %60 = arith.addf %59, %58 : vector<32x32xf32>
    %61 = arith.divf %59, %60 : vector<32x32xf32>
    %62 = vector.extract_strided_slice %55 {offsets = [0, 32], sizes = [32, 32], strides = [1, 1]} : vector<32x128xf32> to vector<32x32xf32>
    %63 = arith.negf %62 : vector<32x32xf32>
    %64 = math.exp %63 : vector<32x32xf32>
    %cst_15 = arith.constant 1.000000e+00 : f32
    %65 = vector.broadcast %cst_15 : f32 to vector<32x32xf32>
    %66 = arith.addf %65, %64 : vector<32x32xf32>
    %67 = arith.divf %65, %66 : vector<32x32xf32>
    %68 = vector.extract_strided_slice %55 {offsets = [0, 64], sizes = [32, 32], strides = [1, 1]} : vector<32x128xf32> to vector<32x32xf32>
    %69 = math.tanh %68 : vector<32x32xf32>
    %70 = vector.extract_strided_slice %55 {offsets = [0, 96], sizes = [32, 32], strides = [1, 1]} : vector<32x128xf32> to vector<32x32xf32>
    %71 = arith.negf %70 : vector<32x32xf32>
    %72 = math.exp %71 : vector<32x32xf32>
    %cst_16 = arith.constant 1.000000e+00 : f32
    %73 = vector.broadcast %cst_16 : f32 to vector<32x32xf32>
    %74 = arith.addf %73, %72 : vector<32x32xf32>
    %75 = arith.divf %73, %74 : vector<32x32xf32>
    %76 = arith.mulf %67, %50 : vector<32x32xf32>
    %77 = arith.mulf %61, %69 : vector<32x32xf32>
    %78 = arith.addf %76, %77 : vector<32x32xf32>
    %79 = math.tanh %78 : vector<32x32xf32>
    %80 = arith.mulf %75, %79 : vector<32x32xf32>
    %c0_17 = arith.constant 0 : index
    %c0_18 = arith.constant 0 : index
    %81 = vector.load %arg4[%c0_17, %c0_18] : memref<32x32xf32, #tpu.memory_space<vmem>>, vector<32x32xf32>
    %cst_19 = arith.constant dense<0.000000e+00> : vector<32x32xf32>
    %82 = tpu.matmul %80, %81, %cst_19 {dimension_numbers = #tpu.dot_dimension_numbers<[1], [0], [0], [1], [0, 0, 1, 1], [], []>} : vector<32x32xf32>, vector<32x32xf32>, vector<32x32xf32> -> vector<32x32xf32>
    %c0_20 = arith.constant 0 : index
    %c0_21 = arith.constant 0 : index
    %83 = vector.load %arg5[%c0_20, %c0_21] : memref<1x32xf32, #tpu.memory_space<vmem>>, vector<1x32xf32>
    %84 = vector.broadcast %83 : vector<1x32xf32> to vector<32x32xf32>
    %85 = arith.addf %82, %84 : vector<32x32xf32>
    %cst_22 = arith.constant 0.000000e+00 : f32
    %86 = vector.broadcast %cst_22 : f32 to vector<32x32xf32>
    %87 = arith.maximumf %85, %86 : vector<32x32xf32>
    %88 = vector.extract_strided_slice %87 {offsets = [0, 0], sizes = [16, 32], strides = [1, 1]} : vector<32x32xf32> to vector<16x32xf32>
    %89 = vector.extract_strided_slice %87 {offsets = [16, 0], sizes = [16, 32], strides = [1, 1]} : vector<32x32xf32> to vector<16x32xf32>
    %90 = arith.addf %88, %89 : vector<16x32xf32>
    %cst_23 = arith.constant 5.000000e-01 : f32
    %91 = vector.broadcast %cst_23 : f32 to vector<16x32xf32>
    %92 = arith.mulf %90, %91 : vector<16x32xf32>
    %c0_24 = arith.constant 0 : index
    %c0_25 = arith.constant 0 : index
    %93 = vector.load %arg6[%c0_24, %c0_25] : memref<1x32xf32, #tpu.memory_space<vmem>>, vector<1x32xf32>
    %c0_26 = arith.constant 0 : index
    %c0_27 = arith.constant 0 : index
    %94 = vector.load %arg7[%c0_26, %c0_27] : memref<1x32xf32, #tpu.memory_space<vmem>>, vector<1x32xf32>
    %cst_28 = arith.constant dense<0.000000e+00> : vector<32xf32>
    %95 = vector.multi_reduction <add>, %92, %cst_28 [0] : vector<16x32xf32> to vector<32xf32>
    %96 = vector.shape_cast %95 : vector<32xf32> to vector<1x32xf32>
    %cst_29 = arith.constant 1.600000e+01 : f32
    %97 = vector.broadcast %cst_29 : f32 to vector<1x32xf32>
    %98 = arith.divf %96, %97 : vector<1x32xf32>
    %99 = vector.broadcast %98 : vector<1x32xf32> to vector<16x32xf32>
    %100 = arith.subf %92, %99 : vector<16x32xf32>
    %101 = arith.mulf %100, %100 : vector<16x32xf32>
    %cst_30 = arith.constant dense<0.000000e+00> : vector<32xf32>
    %102 = vector.multi_reduction <add>, %101, %cst_30 [0] : vector<16x32xf32> to vector<32xf32>
    %103 = vector.shape_cast %102 : vector<32xf32> to vector<1x32xf32>
    %cst_31 = arith.constant 1.600000e+01 : f32
    %104 = vector.broadcast %cst_31 : f32 to vector<1x32xf32>
    %105 = arith.divf %103, %104 : vector<1x32xf32>
    %106 = vector.broadcast %98 : vector<1x32xf32> to vector<16x32xf32>
    %107 = arith.subf %92, %106 : vector<16x32xf32>
    %cst_32 = arith.constant 9.99999974E-6 : f32
    %108 = vector.broadcast %cst_32 : f32 to vector<1x32xf32>
    %109 = arith.addf %105, %108 : vector<1x32xf32>
    %110 = math.rsqrt %109 : vector<1x32xf32>
    %111 = vector.broadcast %110 : vector<1x32xf32> to vector<16x32xf32>
    %112 = arith.mulf %107, %111 : vector<16x32xf32>
    %113 = vector.broadcast %93 : vector<1x32xf32> to vector<16x32xf32>
    %114 = arith.mulf %112, %113 : vector<16x32xf32>
    %115 = vector.broadcast %94 : vector<1x32xf32> to vector<16x32xf32>
    %116 = arith.addf %114, %115 : vector<16x32xf32>
    %c0_33 = arith.constant 0 : index
    %c0_34 = arith.constant 0 : index
    %117 = vector.load %arg8[%c0_33, %c0_34] : memref<8x1000xf32, #tpu.memory_space<vmem>>, vector<8x1000xf32>
    %c0_35 = arith.constant 0 : index
    %c0_36 = arith.constant 0 : index
    %118 = vector.load %arg9[%c0_35, %c0_36] : memref<1000x32xf32, #tpu.memory_space<vmem>>, vector<1000x32xf32>
    %cst_37 = arith.constant dense<0.000000e+00> : vector<8x32xf32>
    %119 = tpu.matmul %117, %118, %cst_37 {dimension_numbers = #tpu.dot_dimension_numbers<[1], [0], [0], [1], [0, 0, 1, 1], [], []>} : vector<8x1000xf32>, vector<1000x32xf32>, vector<8x32xf32> -> vector<8x32xf32>
    %c0_38 = arith.constant 0 : index
    %c0_39 = arith.constant 0 : index
    %120 = vector.load %arg10[%c0_38, %c0_39] : memref<1x32xf32, #tpu.memory_space<vmem>>, vector<1x32xf32>
    %121 = vector.broadcast %120 : vector<1x32xf32> to vector<8x32xf32>
    %122 = arith.addf %119, %121 : vector<8x32xf32>
    %cst_40 = arith.constant 0.000000e+00 : f32
    %123 = vector.broadcast %cst_40 : f32 to vector<8x32xf32>
    %124 = arith.maximumf %122, %123 : vector<8x32xf32>
    %c0_41 = arith.constant 0 : index
    %c0_42 = arith.constant 0 : index
    %125 = vector.load %arg11[%c0_41, %c0_42] : memref<8x1xf32, #tpu.memory_space<vmem>>, vector<8x1xf32>
    %126 = vector.broadcast %125 : vector<8x1xf32> to vector<8x32xf32>
    %127 = arith.mulf %124, %126 : vector<8x32xf32>
    %c0_43 = arith.constant 0 : index
    %c0_44 = arith.constant 0 : index
    %128 = vector.load %arg12[%c0_43, %c0_44] : memref<8x15xf32, #tpu.memory_space<vmem>>, vector<8x15xf32>
    %c0_45 = arith.constant 0 : index
    %c0_46 = arith.constant 0 : index
    %129 = vector.load %arg14[%c0_45, %c0_46] : memref<15x128xf32, #tpu.memory_space<vmem>>, vector<15x128xf32>
    %cst_47 = arith.constant dense<0.000000e+00> : vector<8x128xf32>
    %130 = tpu.matmul %128, %129, %cst_47 {dimension_numbers = #tpu.dot_dimension_numbers<[1], [0], [0], [1], [0, 0, 1, 1], [], []>} : vector<8x15xf32>, vector<15x128xf32>, vector<8x128xf32> -> vector<8x128xf32>
    %c0_48 = arith.constant 0 : index
    %c0_49 = arith.constant 0 : index
    %131 = vector.load %arg13[%c0_48, %c0_49] : memref<8x108xf32, #tpu.memory_space<vmem>>, vector<8x108xf32>
    %c0_50 = arith.constant 0 : index
    %c0_51 = arith.constant 0 : index
    %132 = vector.load %arg15[%c0_50, %c0_51] : memref<108x128xf32, #tpu.memory_space<vmem>>, vector<108x128xf32>
    %cst_52 = arith.constant dense<0.000000e+00> : vector<8x128xf32>
    %133 = tpu.matmul %131, %132, %cst_52 {dimension_numbers = #tpu.dot_dimension_numbers<[1], [0], [0], [1], [0, 0, 1, 1], [], []>} : vector<8x108xf32>, vector<108x128xf32>, vector<8x128xf32> -> vector<8x128xf32>
    %134 = arith.addf %130, %133 : vector<8x128xf32>
    %135 = vector.extract_strided_slice %116 {offsets = [8, 0], sizes = [8, 32], strides = [1, 1]} : vector<16x32xf32> to vector<8x32xf32>
    %c0_53 = arith.constant 0 : index
    %c0_54 = arith.constant 0 : index
    %136 = vector.load %arg16[%c0_53, %c0_54] : memref<32x128xf32, #tpu.memory_space<vmem>>, vector<32x128xf32>
    %cst_55 = arith.constant dense<0.000000e+00> : vector<8x128xf32>
    %137 = tpu.matmul %135, %136, %cst_55 {dimension_numbers = #tpu.dot_dimension_numbers<[1], [0], [0], [1], [0, 0, 1, 1], [], []>} : vector<8x32xf32>, vector<32x128xf32>, vector<8x128xf32> -> vector<8x128xf32>
    %138 = arith.addf %134, %137 : vector<8x128xf32>
    %c0_56 = arith.constant 0 : index
    %c0_57 = arith.constant 0 : index
    %139 = vector.load %arg17[%c0_56, %c0_57] : memref<32x128xf32, #tpu.memory_space<vmem>>, vector<32x128xf32>
    %cst_58 = arith.constant dense<0.000000e+00> : vector<8x128xf32>
    %140 = tpu.matmul %127, %139, %cst_58 {dimension_numbers = #tpu.dot_dimension_numbers<[1], [0], [0], [1], [0, 0, 1, 1], [], []>} : vector<8x32xf32>, vector<32x128xf32>, vector<8x128xf32> -> vector<8x128xf32>
    %141 = arith.addf %138, %140 : vector<8x128xf32>
    %c0_59 = arith.constant 0 : index
    %c0_60 = arith.constant 0 : index
    %142 = vector.load %arg18[%c0_59, %c0_60] : memref<1x128xf32, #tpu.memory_space<vmem>>, vector<1x128xf32>
    %143 = vector.broadcast %142 : vector<1x128xf32> to vector<8x128xf32>
    %144 = arith.addf %141, %143 : vector<8x128xf32>
    %145 = vector.extract_strided_slice %144 {offsets = [0, 0], sizes = [8, 32], strides = [1, 1]} : vector<8x128xf32> to vector<8x32xf32>
    %146 = arith.negf %145 : vector<8x32xf32>
    %147 = math.exp %146 : vector<8x32xf32>
    %cst_61 = arith.constant 1.000000e+00 : f32
    %148 = vector.broadcast %cst_61 : f32 to vector<8x32xf32>
    %149 = arith.addf %148, %147 : vector<8x32xf32>
    %150 = arith.divf %148, %149 : vector<8x32xf32>
    %151 = vector.extract_strided_slice %144 {offsets = [0, 64], sizes = [8, 32], strides = [1, 1]} : vector<8x128xf32> to vector<8x32xf32>
    %152 = math.tanh %151 : vector<8x32xf32>
    %153 = vector.extract_strided_slice %144 {offsets = [0, 96], sizes = [8, 32], strides = [1, 1]} : vector<8x128xf32> to vector<8x32xf32>
    %154 = arith.negf %153 : vector<8x32xf32>
    %155 = math.exp %154 : vector<8x32xf32>
    %cst_62 = arith.constant 1.000000e+00 : f32
    %156 = vector.broadcast %cst_62 : f32 to vector<8x32xf32>
    %157 = arith.addf %156, %155 : vector<8x32xf32>
    %158 = arith.divf %156, %157 : vector<8x32xf32>
    %159 = arith.mulf %150, %152 : vector<8x32xf32>
    %160 = math.tanh %159 : vector<8x32xf32>
    %161 = arith.mulf %158, %160 : vector<8x32xf32>
    %c0_63 = arith.constant 0 : index
    %c0_64 = arith.constant 0 : index
    %162 = vector.load %arg19[%c0_63, %c0_64] : memref<1x32xf32, #tpu.memory_space<vmem>>, vector<1x32xf32>
    %c0_65 = arith.constant 0 : index
    %c0_66 = arith.constant 0 : index
    %163 = vector.load %arg20[%c0_65, %c0_66] : memref<1x32xf32, #tpu.memory_space<vmem>>, vector<1x32xf32>
    %cst_67 = arith.constant dense<0.000000e+00> : vector<32xf32>
    %164 = vector.multi_reduction <add>, %161, %cst_67 [0] : vector<8x32xf32> to vector<32xf32>
    %165 = vector.shape_cast %164 : vector<32xf32> to vector<1x32xf32>
    %cst_68 = arith.constant 8.000000e+00 : f32
    %166 = vector.broadcast %cst_68 : f32 to vector<1x32xf32>
    %167 = arith.divf %165, %166 : vector<1x32xf32>
    %168 = vector.broadcast %167 : vector<1x32xf32> to vector<8x32xf32>
    %169 = arith.subf %161, %168 : vector<8x32xf32>
    %170 = arith.mulf %169, %169 : vector<8x32xf32>
    %cst_69 = arith.constant dense<0.000000e+00> : vector<32xf32>
    %171 = vector.multi_reduction <add>, %170, %cst_69 [0] : vector<8x32xf32> to vector<32xf32>
    %172 = vector.shape_cast %171 : vector<32xf32> to vector<1x32xf32>
    %cst_70 = arith.constant 8.000000e+00 : f32
    %173 = vector.broadcast %cst_70 : f32 to vector<1x32xf32>
    %174 = arith.divf %172, %173 : vector<1x32xf32>
    %175 = vector.broadcast %167 : vector<1x32xf32> to vector<8x32xf32>
    %176 = arith.subf %161, %175 : vector<8x32xf32>
    %cst_71 = arith.constant 9.99999974E-6 : f32
    %177 = vector.broadcast %cst_71 : f32 to vector<1x32xf32>
    %178 = arith.addf %174, %177 : vector<1x32xf32>
    %179 = math.rsqrt %178 : vector<1x32xf32>
    %180 = vector.broadcast %179 : vector<1x32xf32> to vector<8x32xf32>
    %181 = arith.mulf %176, %180 : vector<8x32xf32>
    %182 = vector.broadcast %162 : vector<1x32xf32> to vector<8x32xf32>
    %183 = arith.mulf %181, %182 : vector<8x32xf32>
    %184 = vector.broadcast %163 : vector<1x32xf32> to vector<8x32xf32>
    %185 = arith.addf %183, %184 : vector<8x32xf32>
    %c0_72 = arith.constant 0 : index
    %c0_73 = arith.constant 0 : index
    %186 = vector.load %arg21[%c0_72, %c0_73] : memref<32x64xf32, #tpu.memory_space<vmem>>, vector<32x64xf32>
    %cst_74 = arith.constant dense<0.000000e+00> : vector<8x64xf32>
    %187 = tpu.matmul %185, %186, %cst_74 {dimension_numbers = #tpu.dot_dimension_numbers<[1], [0], [0], [1], [0, 0, 1, 1], [], []>} : vector<8x32xf32>, vector<32x64xf32>, vector<8x64xf32> -> vector<8x64xf32>
    %c0_75 = arith.constant 0 : index
    %c0_76 = arith.constant 0 : index
    %188 = vector.load %arg22[%c0_75, %c0_76] : memref<1x64xf32, #tpu.memory_space<vmem>>, vector<1x64xf32>
    %189 = vector.broadcast %188 : vector<1x64xf32> to vector<8x64xf32>
    %190 = arith.addf %187, %189 : vector<8x64xf32>
    %cst_77 = arith.constant 0.000000e+00 : f32
    %191 = vector.broadcast %cst_77 : f32 to vector<8x64xf32>
    %192 = arith.maximumf %190, %191 : vector<8x64xf32>
    %c0_78 = arith.constant 0 : index
    %c0_79 = arith.constant 0 : index
    %193 = vector.load %arg23[%c0_78, %c0_79] : memref<1x64xf32, #tpu.memory_space<vmem>>, vector<1x64xf32>
    %c0_80 = arith.constant 0 : index
    %c0_81 = arith.constant 0 : index
    %194 = vector.load %arg24[%c0_80, %c0_81] : memref<1x64xf32, #tpu.memory_space<vmem>>, vector<1x64xf32>
    %cst_82 = arith.constant dense<0.000000e+00> : vector<64xf32>
    %195 = vector.multi_reduction <add>, %192, %cst_82 [0] : vector<8x64xf32> to vector<64xf32>
    %196 = vector.shape_cast %195 : vector<64xf32> to vector<1x64xf32>
    %cst_83 = arith.constant 8.000000e+00 : f32
    %197 = vector.broadcast %cst_83 : f32 to vector<1x64xf32>
    %198 = arith.divf %196, %197 : vector<1x64xf32>
    %199 = vector.broadcast %198 : vector<1x64xf32> to vector<8x64xf32>
    %200 = arith.subf %192, %199 : vector<8x64xf32>
    %201 = arith.mulf %200, %200 : vector<8x64xf32>
    %cst_84 = arith.constant dense<0.000000e+00> : vector<64xf32>
    %202 = vector.multi_reduction <add>, %201, %cst_84 [0] : vector<8x64xf32> to vector<64xf32>
    %203 = vector.shape_cast %202 : vector<64xf32> to vector<1x64xf32>
    %cst_85 = arith.constant 8.000000e+00 : f32
    %204 = vector.broadcast %cst_85 : f32 to vector<1x64xf32>
    %205 = arith.divf %203, %204 : vector<1x64xf32>
    %206 = vector.broadcast %198 : vector<1x64xf32> to vector<8x64xf32>
    %207 = arith.subf %192, %206 : vector<8x64xf32>
    %cst_86 = arith.constant 9.99999974E-6 : f32
    %208 = vector.broadcast %cst_86 : f32 to vector<1x64xf32>
    %209 = arith.addf %205, %208 : vector<1x64xf32>
    %210 = math.rsqrt %209 : vector<1x64xf32>
    %211 = vector.broadcast %210 : vector<1x64xf32> to vector<8x64xf32>
    %212 = arith.mulf %207, %211 : vector<8x64xf32>
    %213 = vector.broadcast %193 : vector<1x64xf32> to vector<8x64xf32>
    %214 = arith.mulf %212, %213 : vector<8x64xf32>
    %215 = vector.broadcast %194 : vector<1x64xf32> to vector<8x64xf32>
    %216 = arith.addf %214, %215 : vector<8x64xf32>
    %c0_87 = arith.constant 0 : index
    %c0_88 = arith.constant 0 : index
    %217 = vector.load %arg25[%c0_87, %c0_88] : memref<64x64xf32, #tpu.memory_space<vmem>>, vector<64x64xf32>
    %cst_89 = arith.constant dense<0.000000e+00> : vector<8x64xf32>
    %218 = tpu.matmul %216, %217, %cst_89 {dimension_numbers = #tpu.dot_dimension_numbers<[1], [0], [0], [1], [0, 0, 1, 1], [], []>} : vector<8x64xf32>, vector<64x64xf32>, vector<8x64xf32> -> vector<8x64xf32>
    %c0_90 = arith.constant 0 : index
    %c0_91 = arith.constant 0 : index
    %219 = vector.load %arg26[%c0_90, %c0_91] : memref<1x64xf32, #tpu.memory_space<vmem>>, vector<1x64xf32>
    %220 = vector.broadcast %219 : vector<1x64xf32> to vector<8x64xf32>
    %221 = arith.addf %218, %220 : vector<8x64xf32>
    %cst_92 = arith.constant 0.000000e+00 : f32
    %222 = vector.broadcast %cst_92 : f32 to vector<8x64xf32>
    %223 = arith.maximumf %221, %222 : vector<8x64xf32>
    %c0_93 = arith.constant 0 : index
    %c0_94 = arith.constant 0 : index
    %224 = vector.load %arg27[%c0_93, %c0_94] : memref<64x2xf32, #tpu.memory_space<vmem>>, vector<64x2xf32>
    %cst_95 = arith.constant dense<0.000000e+00> : vector<8x2xf32>
    %225 = tpu.matmul %223, %224, %cst_95 {dimension_numbers = #tpu.dot_dimension_numbers<[1], [0], [0], [1], [0, 0, 1, 1], [], []>} : vector<8x64xf32>, vector<64x2xf32>, vector<8x2xf32> -> vector<8x2xf32>
    %c0_96 = arith.constant 0 : index
    %c0_97 = arith.constant 0 : index
    %226 = vector.load %arg28[%c0_96, %c0_97] : memref<1x2xf32, #tpu.memory_space<vmem>>, vector<1x2xf32>
    %227 = vector.broadcast %226 : vector<1x2xf32> to vector<8x2xf32>
    %228 = arith.addf %225, %227 : vector<8x2xf32>
    %229 = arith.negf %228 : vector<8x2xf32>
    %230 = math.exp %229 : vector<8x2xf32>
    %cst_98 = arith.constant 1.000000e+00 : f32
    %231 = vector.broadcast %cst_98 : f32 to vector<8x2xf32>
    %232 = arith.addf %231, %230 : vector<8x2xf32>
    %233 = arith.divf %231, %232 : vector<8x2xf32>
    %c0_99 = arith.constant 0 : index
    %c0_100 = arith.constant 0 : index
    %234 = vector.load %arg29[%c0_99, %c0_100] : memref<8x2xf32, #tpu.memory_space<vmem>>, vector<8x2xf32>
    tpu.vector_store %arg29[%c0_99, %c0_100], %233 {strides = array<i32>} : memref<8x2xf32, #tpu.memory_space<vmem>>, vector<8x2xf32>,
    return
  }
}

</mosaic_0001>

<llo_original>
// kernel: representation_forward.1
$region0: #{representation_forward.1}
  #allocation0 [shape = 'u32[]', space=smem, size = 0x4, offset = 0x4, fixed_abs, tag = 'smem constant byte address 0x4 - core index']
  #allocation1 [shape = 'u32[72,128]{1,0:T(1,128)}', space=vmem, size = 0x9000, scoped, tag = 'internal scratch']
  %s0 = inlined_call_operand.smem [shape: u32[30], index: -1, kind: input, shape index: {}]
  %s1 = sld [smem:[%s0]]
  %s2 = scalar_lea.smem %s0, 1
  %s3 = sld [smem:[%s2]]
  %s4 = scalar_lea.smem %s0, 2
  %s5 = sld [smem:[%s4]]
  %s6 = scalar_lea.smem %s0, 3
  %s7 = sld [smem:[%s6]]
  %s8 = scalar_lea.smem %s0, 4
  %s9 = sld [smem:[%s8]]
  %s10 = scalar_lea.smem %s0, 5
  %s11 = sld [smem:[%s10]]
  %s12 = scalar_lea.smem %s0, 6
  %s13 = sld [smem:[%s12]]
  %s14 = scalar_lea.smem %s0, 7
  %s15 = sld [smem:[%s14]]
  %s16 = scalar_lea.smem %s0, 8
  %s17 = sld [smem:[%s16]]
  %s18 = scalar_lea.smem %s0, 9
  %s19 = sld [smem:[%s18]]
  %s20 = scalar_lea.smem %s0, 10
  %s21 = sld [smem:[%s20]]
  %s22 = scalar_lea.smem %s0, 11
  %s23 = sld [smem:[%s22]]
  %s24 = scalar_lea.smem %s0, 12
  %s25 = sld [smem:[%s24]]
  %s26 = scalar_lea.smem %s0, 13
  %s27 = sld [smem:[%s26]]
  %s28 = scalar_lea.smem %s0, 14
  %s29 = sld [smem:[%s28]]
  %s30 = scalar_lea.smem %s0, 15
  %s31 = sld [smem:[%s30]]
  %s32 = scalar_lea.smem %s0, 16
  %s33 = sld [smem:[%s32]]
  %s34 = scalar_lea.smem %s0, 17
  %s35 = sld [smem:[%s34]]
  %s36 = scalar_lea.smem %s0, 18
  %s37 = sld [smem:[%s36]]
  %s38 = scalar_lea.smem %s0, 19
  %s39 = sld [smem:[%s38]]
  %s40 = scalar_lea.smem %s0, 20
  %s41 = sld [smem:[%s40]]
  %s42 = scalar_lea.smem %s0, 21
  %s43 = sld [smem:[%s42]]
  %s44 = scalar_lea.smem %s0, 22
  %s45 = sld [smem:[%s44]]
  %s46 = scalar_lea.smem %s0, 23
  %s47 = sld [smem:[%s46]]
  %s48 = scalar_lea.smem %s0, 24
  %s49 = sld [smem:[%s48]]
  %s50 = scalar_lea.smem %s0, 25
  %s51 = sld [smem:[%s50]]
  %s52 = scalar_lea.smem %s0, 26
  %s53 = sld [smem:[%s52]]
  %s54 = scalar_lea.smem %s0, 27
  %s55 = sld [smem:[%s54]]
  %s56 = scalar_lea.smem %s0, 28
  %s57 = sld [smem:[%s56]]
  %s58 = scalar_lea.smem %s0, 29
  %s59 = sld [smem:[%s58]]
  %s60 = sld [smem:[#allocation0]]
  $region126: #{representation_forward.1} parent=0
    _
  %s62 = ssub.s32 1, %s60
  %s63 = scalar_select 0, %s62, %s60
  // Predicated region
  $region2: #{representation_forward.1} parent=0 // pred_check
    _
  $region3: #{representation_forward.1} parent=0 // pred_check_branch
    %65 = sbr.rel (0) target = $region5
  $region4: #{representation_forward.1} parent=0 // pred_region
    _
  $region5: #{representation_forward.1} parent=0 // pred_fallthru
    _
  // Predicated region
  $region6: #{representation_forward.1} parent=0 // pred_check
    _
  $region7: #{representation_forward.1} parent=0 // pred_check_branch
    %67 = sbr.rel (0) target = $region9
  $region8: #{representation_forward.1} parent=0 // pred_region
    _
  $region9: #{representation_forward.1} parent=0 // pred_fallthru
    _
  // Predicated region
  $region10: #{representation_forward.1} parent=0 // pred_check
    _
  $region11: #{representation_forward.1} parent=0 // pred_check_branch
    %69 = sbr.rel (0) target = $region13
  $region12: #{representation_forward.1} parent=0 // pred_region
    _
  $region13: #{representation_forward.1} parent=0 // pred_fallthru
    _
  // Predicated region
  $region14: #{representation_forward.1} parent=0 // pred_check
    _
  $region15: #{representation_forward.1} parent=0 // pred_check_branch
    %71 = sbr.rel (0) target = $region17
  $region16: #{representation_forward.1} parent=0 // pred_region
    _
  $region17: #{representation_forward.1} parent=0 // pred_fallthru
    _
  // Predicated region
  $region18: #{representation_forward.1} parent=0 // pred_check
    _
  $region19: #{representation_forward.1} parent=0 // pred_check_branch
    %73 = sbr.rel (0) target = $region21
  $region20: #{representation_forward.1} parent=0 // pred_region
    _
  $region21: #{representation_forward.1} parent=0 // pred_fallthru
    _
  // Predicated region
  $region22: #{representation_forward.1} parent=0 // pred_check
    _
  $region23: #{representation_forward.1} parent=0 // pred_check_branch
    %75 = sbr.rel (0) target = $region25
  $region24: #{representation_forward.1} parent=0 // pred_region
    _
  $region25: #{representation_forward.1} parent=0 // pred_fallthru
    _
  // Predicated region
  $region26: #{representation_forward.1} parent=0 // pred_check
    _
  $region27: #{representation_forward.1} parent=0 // pred_check_branch
    %77 = sbr.rel (0) target = $region29
  $region28: #{representation_forward.1} parent=0 // pred_region
    _
  $region29: #{representation_forward.1} parent=0 // pred_fallthru
    _
  // Predicated region
  $region30: #{representation_forward.1} parent=0 // pred_check
    _
  $region31: #{representation_forward.1} parent=0 // pred_check_branch
    %79 = sbr.rel (0) target = $region33
  $region32: #{representation_forward.1} parent=0 // pred_region
    _
  $region33: #{representation_forward.1} parent=0 // pred_fallthru
    _
  // Predicated region
  $region34: #{representation_forward.1} parent=0 // pred_check
    _
  $region35: #{representation_forward.1} parent=0 // pred_check_branch
    %81 = sbr.rel (0) target = $region37
  $region36: #{representation_forward.1} parent=0 // pred_region
    _
  $region37: #{representation_forward.1} parent=0 // pred_fallthru
    _
  // Predicated region
  $region38: #{representation_forward.1} parent=0 // pred_check
    _
  $region39: #{representation_forward.1} parent=0 // pred_check_branch
    %83 = sbr.rel (0) target = $region41
  $region40: #{representation_forward.1} parent=0 // pred_region
    _
  $region41: #{representation_forward.1} parent=0 // pred_fallthru
    _
  // Predicated region
  $region42: #{representation_forward.1} parent=0 // pred_check
    _
  $region43: #{representation_forward.1} parent=0 // pred_check_branch
    %85 = sbr.rel (0) target = $region45
  $region44: #{representation_forward.1} parent=0 // pred_region
    _
  $region45: #{representation_forward.1} parent=0 // pred_fallthru
    _
  // Predicated region
  $region46: #{representation_forward.1} parent=0 // pred_check
    _
  $region47: #{representation_forward.1} parent=0 // pred_check_branch
    %87 = sbr.rel (0) target = $region49
  $region48: #{representation_forward.1} parent=0 // pred_region
    _
  $region49: #{representation_forward.1} parent=0 // pred_fallthru
    _
  // Predicated region
  $region50: #{representation_forward.1} parent=0 // pred_check
    _
  $region51: #{representation_forward.1} parent=0 // pred_check_branch
    %89 = sbr.rel (0) target = $region53
  $region52: #{representation_forward.1} parent=0 // pred_region
    _
  $region53: #{representation_forward.1} parent=0 // pred_fallthru
    _
  // Predicated region
  $region54: #{representation_forward.1} parent=0 // pred_check
    _
  $region55: #{representation_forward.1} parent=0 // pred_check_branch
    %91 = sbr.rel (0) target = $region57
  $region56: #{representation_forward.1} parent=0 // pred_region
    _
  $region57: #{representation_forward.1} parent=0 // pred_fallthru
    _
  // Predicated region
  $region58: #{representation_forward.1} parent=0 // pred_check
    _
  $region59: #{representation_forward.1} parent=0 // pred_check_branch
    %93 = sbr.rel (0) target = $region61
  $region60: #{representation_forward.1} parent=0 // pred_region
    _
  $region61: #{representation_forward.1} parent=0 // pred_fallthru
    _
  // Predicated region
  $region62: #{representation_forward.1} parent=0 // pred_check
    _
  $region63: #{representation_forward.1} parent=0 // pred_check_branch
    %95 = sbr.rel (0) target = $region65
  $region64: #{representation_forward.1} parent=0 // pred_region
    _
  $region65: #{representation_forward.1} parent=0 // pred_fallthru
    _
  // Predicated region
  $region66: #{representation_forward.1} parent=0 // pred_check
    _
  $region67: #{representation_forward.1} parent=0 // pred_check_branch
    %97 = sbr.rel (0) target = $region69
  $region68: #{representation_forward.1} parent=0 // pred_region
    _
  $region69: #{representation_forward.1} parent=0 // pred_fallthru
    _
  // Predicated region
  $region70: #{representation_forward.1} parent=0 // pred_check
    _
  $region71: #{representation_forward.1} parent=0 // pred_check_branch
    %99 = sbr.rel (0) target = $region73
  $region72: #{representation_forward.1} parent=0 // pred_region
    _
  $region73: #{representation_forward.1} parent=0 // pred_fallthru
    _
  // Predicated region
  $region74: #{representation_forward.1} parent=0 // pred_check
    _
  $region75: #{representation_forward.1} parent=0 // pred_check_branch
    %101 = sbr.rel (0) target = $region77
  $region76: #{representation_forward.1} parent=0 // pred_region
    _
  $region77: #{representation_forward.1} parent=0 // pred_fallthru
    _
  // Predicated region
  $region78: #{representation_forward.1} parent=0 // pred_check
    _
  $region79: #{representation_forward.1} parent=0 // pred_check_branch
    %103 = sbr.rel (0) target = $region81
  $region80: #{representation_forward.1} parent=0 // pred_region
    _
  $region81: #{representation_forward.1} parent=0 // pred_fallthru
    _
  // Predicated region
  $region82: #{representation_forward.1} parent=0 // pred_check
    _
  $region83: #{representation_forward.1} parent=0 // pred_check_branch
    %105 = sbr.rel (0) target = $region85
  $region84: #{representation_forward.1} parent=0 // pred_region
    _
  $region85: #{representation_forward.1} parent=0 // pred_fallthru
    _
  // Predicated region
  $region86: #{representation_forward.1} parent=0 // pred_check
    _
  $region87: #{representation_forward.1} parent=0 // pred_check_branch
    %107 = sbr.rel (0) target = $region89
  $region88: #{representation_forward.1} parent=0 // pred_region
    _
  $region89: #{representation_forward.1} parent=0 // pred_fallthru
    _
  // Predicated region
  $region90: #{representation_forward.1} parent=0 // pred_check
    _
  $region91: #{representation_forward.1} parent=0 // pred_check_branch
    %109 = sbr.rel (0) target = $region93
  $region92: #{representation_forward.1} parent=0 // pred_region
    _
  $region93: #{representation_forward.1} parent=0 // pred_fallthru
    _
  // Predicated region
  $region94: #{representation_forward.1} parent=0 // pred_check
    _
  $region95: #{representation_forward.1} parent=0 // pred_check_branch
    %111 = sbr.rel (0) target = $region97
  $region96: #{representation_forward.1} parent=0 // pred_region
    _
  $region97: #{representation_forward.1} parent=0 // pred_fallthru
    _
  // Predicated region
  $region98: #{representation_forward.1} parent=0 // pred_check
    _
  $region99: #{representation_forward.1} parent=0 // pred_check_branch
    %113 = sbr.rel (0) target = $region101
  $region100: #{representation_forward.1} parent=0 // pred_region
    _
  $region101: #{representation_forward.1} parent=0 // pred_fallthru
    _
  // Predicated region
  $region102: #{representation_forward.1} parent=0 // pred_check
    _
  $region103: #{representation_forward.1} parent=0 // pred_check_branch
    %115 = sbr.rel (0) target = $region105
  $region104: #{representation_forward.1} parent=0 // pred_region
    _
  $region105: #{representation_forward.1} parent=0 // pred_fallthru
    _
  // Predicated region
  $region106: #{representation_forward.1} parent=0 // pred_check
    _
  $region107: #{representation_forward.1} parent=0 // pred_check_branch
    %117 = sbr.rel (0) target = $region109
  $region108: #{representation_forward.1} parent=0 // pred_region
    _
  $region109: #{representation_forward.1} parent=0 // pred_fallthru
    _
  // Predicated region
  $region110: #{representation_forward.1} parent=0 // pred_check
    _
  $region111: #{representation_forward.1} parent=0 // pred_check_branch
    %119 = sbr.rel (0) target = $region113
  $region112: #{representation_forward.1} parent=0 // pred_region
    _
  $region113: #{representation_forward.1} parent=0 // pred_fallthru
    _
  // Predicated region
  $region114: #{representation_forward.1} parent=0 // pred_check
    _
  $region115: #{representation_forward.1} parent=0 // pred_check_branch
    %121 = sbr.rel (0) target = $region117
  $region116: #{representation_forward.1} parent=0 // pred_region
    _
  $region117: #{representation_forward.1} parent=0 // pred_fallthru
    _
  %v122 = vld [vmem:[%s1] sm:$0xff]
  %v123 = vld [vmem:[%s1 + $0x8] sm:$0xff]
  %v124 = vld [vmem:[%s1 + $0x10] sm:$0xff]
  %v125 = vld [vmem:[%s1 + $0x18] sm:$0xff]
  %v126 = vld [vmem:[%s1 + $0x20] sm:$0xff]
  %v127 = vld [vmem:[%s1 + $0x28] sm:$0xff]
  %v128 = vld [vmem:[%s1 + $0x30] sm:$0xff]
  %v129 = vld [vmem:[%s1 + $0x38] sm:$0xff]
  %v130 = vld [vmem:[%s1 + $0x40] sm:$0xff]
  %v131 = vld [vmem:[%s1 + $0x48] sm:$0xff]
  %v132 = vld [vmem:[%s1 + $0x50] sm:$0xff]
  %v133 = vld [vmem:[%s1 + $0x58] sm:$0xff]
  %v134 = vld [vmem:[%s3] sm:$0xff]
  %v135 = vld [vmem:[%s3 + $0x8] sm:$0x1f]
  %v136 = vld [vmem:[%s7] sm:$0x1]
  %v138 = vperm.slane %v136, 0
  %vm140 = vcmask 105472
  %v142 = vsel %vm140, %v122, 0
  %v145 = vsel %vm140, %v123, 0
  %v148 = vsel %vm140, %v124, 0
  %v151 = vsel %vm140, %v125, 0
  %v154 = vsel %vm140, %v126, 0
  %v157 = vsel %vm140, %v127, 0
  %v160 = vsel %vm140, %v128, 0
  %v163 = vsel %vm140, %v129, 0
  %v166 = vsel %vm140, %v130, 0
  %v169 = vsel %vm140, %v131, 0
  %v172 = vsel %vm140, %v132, 0
  %v175 = vsel %vm140, %v133, 0
  %vm177 = vcmask 1044480
  %v179 = vsel %vm177, %v135, 0
  %181 = vmatpush.msra.mxu0 0.0
  %182 = vmatpush.msra.mxu0 0.0
  %183 = vmatpush.msra.mxu0 0.0
  %184 = vmatpush.msra.mxu0 0.0
  %185 = vmatpush.msra.mxu0 0.0
  %186 = vmatpush.msra.mxu0 0.0
  %187 = vmatpush.msra.mxu0 0.0
  %188 = vmatpush.msra.mxu0 0.0
  %189 = vmatpush.msra.mxu0 0.0
  %190 = vmatpush.msra.mxu0 0.0
  %191 = vmatpush.msra.mxu0 0.0
  %192 = vmatpush.msra.mxu0 0.0
  %193 = vmatpush.msra.mxu0 0.0
  %194 = vmatpush.msra.mxu0 0.0
  %195 = vmatpush.msra.mxu0 %v179
  %196 = vmatpush.msra.mxu0 %v134
  %197 = vmatmul.f32.gmra.mxu0 %v142
  %v198 = vpop.f32.mrf.mxu0
  %v199 = vadd.f32 %v138, %v198
  %200 = vmatmul.f32.gmra.mxu0 %v145
  %v201 = vpop.f32.mrf.mxu0
  %v202 = vadd.f32 %v138, %v201
  %203 = vmatmul.f32.gmra.mxu0 %v148
  %v204 = vpop.f32.mrf.mxu0
  %v205 = vadd.f32 %v138, %v204
  %206 = vmatmul.f32.gmra.mxu0 %v151
  %v207 = vpop.f32.mrf.mxu0
  %v208 = vadd.f32 %v138, %v207
  %209 = vmatmul.f32.gmra.mxu0 %v154
  %v210 = vpop.f32.mrf.mxu0
  %v211 = vadd.f32 %v138, %v210
  %212 = vmatmul.f32.gmra.mxu0 %v157
  %v213 = vpop.f32.mrf.mxu0
  %v214 = vadd.f32 %v138, %v213
  %215 = vmatmul.f32.gmra.mxu0 %v160
  %v216 = vpop.f32.mrf.mxu0
  %v217 = vadd.f32 %v138, %v216
  %218 = vmatmul.f32.gmra.mxu0 %v163
  %v219 = vpop.f32.mrf.mxu0
  %v220 = vadd.f32 %v138, %v219
  %221 = vmatmul.f32.gmra.mxu0 %v166
  %v222 = vpop.f32.mrf.mxu0
  %v223 = vadd.f32 %v138, %v222
  %224 = vmatmul.f32.gmra.mxu0 %v169
  %v225 = vpop.f32.mrf.mxu0
  %v226 = vadd.f32 %v138, %v225
  %227 = vmatmul.f32.gmra.mxu0 %v172
  %v228 = vpop.f32.mrf.mxu0
  %v229 = vadd.f32 %v138, %v228
  %230 = vmatmul.f32.gmra.mxu0 %v175
  %v231 = vpop.f32.mrf.mxu0
  %v232 = vadd.f32 %v138, %v231
  %233 = vdwg.mxu0
  %v234 = vld [vmem:[%s5] sm:$0xff]
  %v235 = vld [vmem:[%s5 + $0x8] sm:$0xff]
  %v236 = vld [vmem:[%s5 + $0x10] sm:$0xff]
  %v237 = vld [vmem:[%s5 + $0x18] sm:$0xff]
  %v238 = vxor.u32 %v199, 2147483648
  %v239 = vxor.u32 %v202, 2147483648
  %v240 = vxor.u32 %v205, 2147483648
  %v241 = vxor.u32 %v208, 2147483648
  %v242 = vmul.f32 %v238, 1.442695
  %v243 = vpow.pop %v242
  %v244 = vmul.f32 %v239, 1.442695
  %v245 = vpow.pop %v244
  %v246 = vmul.f32 %v240, 1.442695
  %v247 = vpow.pop %v246
  %v248 = vmul.f32 %v241, 1.442695
  %v249 = vpow.pop %v248
  %v250 = vadd.f32 %v243, 1.0
  %v251 = vadd.f32 %v245, 1.0
  %v252 = vadd.f32 %v247, 1.0
  %v253 = vadd.f32 %v249, 1.0
  %v254 = vrcp.pop %v250
  %v255 = vmul.f32 %v250, %v254
  %v256 = vsub.f32 1.0, %v255
  %v257 = vmul.f32 %v254, %v256
  %v258 = vadd.f32 %v254, %v257
  %vm259 = vweird.f32 %v250
  %vm260 = vweird.f32 %v254
  %vm261 = vmor %vm259, %vm260
  %v262 = vsel %vm261, %v254, %v258
  %v263 = vand.u32 2147483647, %v250
  %vm264 = vcmp.eq.f32.partialorder %v263, 8.507059e+37
  %v265 = vand.u32 %v250, 2147483648
  %v266 = vor.u32 1.1754944e-38, %v265
  %v267 = vsel %vm264, %v266, %v262
  %v268 = vmul.f32 1.0, %v267
  %v269 = vrcp.pop %v251
  %v270 = vmul.f32 %v251, %v269
  %v271 = vsub.f32 1.0, %v270
  %v272 = vmul.f32 %v269, %v271
  %v273 = vadd.f32 %v269, %v272
  %vm274 = vweird.f32 %v251
  %vm275 = vweird.f32 %v269
  %vm276 = vmor %vm274, %vm275
  %v277 = vsel %vm276, %v269, %v273
  %v278 = vand.u32 2147483647, %v251
  %vm279 = vcmp.eq.f32.partialorder %v278, 8.507059e+37
  %v280 = vand.u32 %v251, 2147483648
  %v281 = vor.u32 1.1754944e-38, %v280
  %v282 = vsel %vm279, %v281, %v277
  %v283 = vmul.f32 1.0, %v282
  %v284 = vrcp.pop %v252
  %v285 = vmul.f32 %v252, %v284
  %v286 = vsub.f32 1.0, %v285
  %v287 = vmul.f32 %v284, %v286
  %v288 = vadd.f32 %v284, %v287
  %vm289 = vweird.f32 %v252
  %vm290 = vweird.f32 %v284
  %vm291 = vmor %vm289, %vm290
  %v292 = vsel %vm291, %v284, %v288
  %v293 = vand.u32 2147483647, %v252
  %vm294 = vcmp.eq.f32.partialorder %v293, 8.507059e+37
  %v295 = vand.u32 %v252, 2147483648
  %v296 = vor.u32 1.1754944e-38, %v295
  %v297 = vsel %vm294, %v296, %v292
  %v298 = vmul.f32 1.0, %v297
  %v299 = vrcp.pop %v253
  %v300 = vmul.f32 %v253, %v299
  %v301 = vsub.f32 1.0, %v300
  %v302 = vmul.f32 %v299, %v301
  %v303 = vadd.f32 %v299, %v302
  %vm304 = vweird.f32 %v253
  %vm305 = vweird.f32 %v299
  %vm306 = vmor %vm304, %vm305
  %v307 = vsel %vm306, %v299, %v303
  %v308 = vand.u32 2147483647, %v253
  %vm309 = vcmp.eq.f32.partialorder %v308, 8.507059e+37
  %v310 = vand.u32 %v253, 2147483648
  %v311 = vor.u32 1.1754944e-38, %v310
  %v312 = vsel %vm309, %v311, %v307
  %v313 = vmul.f32 1.0, %v312
  %v314 = vtanh.pop %v199
  %v315 = vtanh.pop %v202
  %v316 = vtanh.pop %v205
  %v317 = vtanh.pop %v208
  %322 = vrot.lane.b32.xlu0 %v314, 64
  %v323 = vpop.permute.xlu0 %322
  %324 = vrot.lane.b32.xlu0 %v315, 64
  %v325 = vpop.permute.xlu0 %324
  %326 = vrot.lane.b32.xlu0 %v316, 64
  %v327 = vpop.permute.xlu0 %326
  %328 = vrot.lane.b32.xlu0 %v317, 64
  %v329 = vpop.permute.xlu0 %328
  %v334 = vmul.f32 %v268, %v323
  %v335 = vmul.f32 %v283, %v325
  %v336 = vmul.f32 %v298, %v327
  %v337 = vmul.f32 %v313, %v329
  %v338 = vtanh.pop %v334
  %v339 = vtanh.pop %v335
  %v340 = vtanh.pop %v336
  %v341 = vtanh.pop %v337
  %346 = vrot.lane.b32.xlu0 %v338, 96
  %v347 = vpop.permute.xlu0 %346
  %348 = vrot.lane.b32.xlu0 %v339, 96
  %v349 = vpop.permute.xlu0 %348
  %350 = vrot.lane.b32.xlu0 %v340, 96
  %v351 = vpop.permute.xlu0 %350
  %352 = vrot.lane.b32.xlu0 %v341, 96
  %v353 = vpop.permute.xlu0 %352
  %v358 = vmul.f32 %v268, %v347
  %v359 = vmul.f32 %v283, %v349
  %v360 = vmul.f32 %v298, %v351
  %v361 = vmul.f32 %v313, %v353
  %366 = vrot.lane.b32.xlu0 %v358, 32
  %v367 = vpop.permute.xlu0 %366
  %368 = vrot.lane.b32.xlu0 %v359, 32
  %v369 = vpop.permute.xlu0 %368
  %370 = vrot.lane.b32.xlu0 %v360, 32
  %v371 = vpop.permute.xlu0 %370
  %372 = vrot.lane.b32.xlu0 %v361, 32
  %v373 = vpop.permute.xlu0 %372
  %vm374 = vcmask 261120
  %v375 = vsel %vm374, %v367, 0
  %v377 = vsel %vm374, %v369, 0
  %v379 = vsel %vm374, %v371, 0
  %v381 = vsel %vm374, %v373, 0
  %383 = vmatpush.msra.mxu0 0.0
  %384 = vmatpush.msra.mxu0 0.0
  %385 = vmatpush.msra.mxu0 0.0
  %386 = vmatpush.msra.mxu0 0.0
  %387 = vmatpush.msra.mxu0 0.0
  %388 = vmatpush.msra.mxu0 0.0
  %389 = vmatpush.msra.mxu0 0.0
  %390 = vmatpush.msra.mxu0 0.0
  %391 = vmatpush.msra.mxu0 0.0
  %392 = vmatpush.msra.mxu0 0.0
  %393 = vmatpush.msra.mxu0 0.0
  %394 = vmatpush.msra.mxu0 0.0
  %395 = vmatpush.msra.mxu0 %v237
  %396 = vmatpush.msra.mxu0 %v236
  %397 = vmatpush.msra.mxu0 %v235
  %398 = vmatpush.msra.mxu0 %v234
  %399 = vmatmul.f32.gmra.mxu0 %v375
  %v400 = vpop.f32.mrf.mxu0
  %v401 = vadd.f32 0.0, %v400
  %402 = vmatmul.f32.gmra.mxu0 %v377
  %v403 = vpop.f32.mrf.mxu0
  %v404 = vadd.f32 0.0, %v403
  %405 = vmatmul.f32.gmra.mxu0 %v379
  %v406 = vpop.f32.mrf.mxu0
  %v407 = vadd.f32 0.0, %v406
  %408 = vmatmul.f32.gmra.mxu0 %v381
  %v409 = vpop.f32.mrf.mxu0
  %v410 = vadd.f32 0.0, %v409
  %411 = vdwg.mxu0
  %v412 = vadd.f32 %v211, %v401
  %v413 = vadd.f32 %v214, %v404
  %v414 = vadd.f32 %v217, %v407
  %v415 = vadd.f32 %v220, %v410
  %v416 = vxor.u32 %v412, 2147483648
  %v417 = vxor.u32 %v413, 2147483648
  %v418 = vxor.u32 %v414, 2147483648
  %v419 = vxor.u32 %v415, 2147483648
  %v420 = vmul.f32 %v416, 1.442695
  %v421 = vpow.pop %v420
  %v422 = vmul.f32 %v417, 1.442695
  %v423 = vpow.pop %v422
  %v424 = vmul.f32 %v418, 1.442695
  %v425 = vpow.pop %v424
  %v426 = vmul.f32 %v419, 1.442695
  %v427 = vpow.pop %v426
  %v428 = vadd.f32 %v421, 1.0
  %v429 = vadd.f32 %v423, 1.0
  %v430 = vadd.f32 %v425, 1.0
  %v431 = vadd.f32 %v427, 1.0
  %v432 = vrcp.pop %v428
  %v433 = vmul.f32 %v428, %v432
  %v434 = vsub.f32 1.0, %v433
  %v435 = vmul.f32 %v432, %v434
  %v436 = vadd.f32 %v432, %v435
  %vm437 = vweird.f32 %v428
  %vm438 = vweird.f32 %v432
  %vm439 = vmor %vm437, %vm438
  %v440 = vsel %vm439, %v432, %v436
  %v441 = vand.u32 2147483647, %v428
  %vm442 = vcmp.eq.f32.partialorder %v441, 8.507059e+37
  %v443 = vand.u32 %v428, 2147483648
  %v444 = vor.u32 1.1754944e-38, %v443
  %v445 = vsel %vm442, %v444, %v440
  %v446 = vmul.f32 1.0, %v445
  %v447 = vrcp.pop %v429
  %v448 = vmul.f32 %v429, %v447
  %v449 = vsub.f32 1.0, %v448
  %v450 = vmul.f32 %v447, %v449
  %v451 = vadd.f32 %v447, %v450
  %vm452 = vweird.f32 %v429
  %vm453 = vweird.f32 %v447
  %vm454 = vmor %vm452, %vm453
  %v455 = vsel %vm454, %v447, %v451
  %v456 = vand.u32 2147483647, %v429
  %vm457 = vcmp.eq.f32.partialorder %v456, 8.507059e+37
  %v458 = vand.u32 %v429, 2147483648
  %v459 = vor.u32 1.1754944e-38, %v458
  %v460 = vsel %vm457, %v459, %v455
  %v461 = vmul.f32 1.0, %v460
  %v462 = vrcp.pop %v430
  %v463 = vmul.f32 %v430, %v462
  %v464 = vsub.f32 1.0, %v463
  %v465 = vmul.f32 %v462, %v464
  %v466 = vadd.f32 %v462, %v465
  %vm467 = vweird.f32 %v430
  %vm468 = vweird.f32 %v462
  %vm469 = vmor %vm467, %vm468
  %v470 = vsel %vm469, %v462, %v466
  %v471 = vand.u32 2147483647, %v430
  %vm472 = vcmp.eq.f32.partialorder %v471, 8.507059e+37
  %v473 = vand.u32 %v430, 2147483648
  %v474 = vor.u32 1.1754944e-38, %v473
  %v475 = vsel %vm472, %v474, %v470
  %v476 = vmul.f32 1.0, %v475
  %v477 = vrcp.pop %v431
  %v478 = vmul.f32 %v431, %v477
  %v479 = vsub.f32 1.0, %v478
  %v480 = vmul.f32 %v477, %v479
  %v481 = vadd.f32 %v477, %v480
  %vm482 = vweird.f32 %v431
  %vm483 = vweird.f32 %v477
  %vm484 = vmor %vm482, %vm483
  %v485 = vsel %vm484, %v477, %v481
  %v486 = vand.u32 2147483647, %v431
  %vm487 = vcmp.eq.f32.partialorder %v486, 8.507059e+37
  %v488 = vand.u32 %v431, 2147483648
  %v489 = vor.u32 1.1754944e-38, %v488
  %v490 = vsel %vm487, %v489, %v485
  %v491 = vmul.f32 1.0, %v490
  %v492 = vtanh.pop %v412
  %v493 = vtanh.pop %v413
  %v494 = vtanh.pop %v414
  %v495 = vtanh.pop %v415
  %500 = vrot.lane.b32.xlu0 %v334, 32
  %v501 = vpop.permute.xlu0 %500
  %502 = vrot.lane.b32.xlu0 %v335, 32
  %v503 = vpop.permute.xlu0 %502
  %504 = vrot.lane.b32.xlu0 %v336, 32
  %v505 = vpop.permute.xlu0 %504
  %506 = vrot.lane.b32.xlu0 %v337, 32
  %v507 = vpop.permute.xlu0 %506
  %v512 = vmul.f32 %v446, %v501
  %v513 = vmul.f32 %v461, %v503
  %v514 = vmul.f32 %v476, %v505
  %v515 = vmul.f32 %v491, %v507
  %520 = vrot.lane.b32.xlu0 %v492, 64
  %v521 = vpop.permute.xlu0 %520
  %522 = vrot.lane.b32.xlu0 %v493, 64
  %v523 = vpop.permute.xlu0 %522
  %524 = vrot.lane.b32.xlu0 %v494, 64
  %v525 = vpop.permute.xlu0 %524
  %526 = vrot.lane.b32.xlu0 %v495, 64
  %v527 = vpop.permute.xlu0 %526
  %v532 = vmul.f32 %v446, %v521
  %v533 = vmul.f32 %v461, %v523
  %v534 = vmul.f32 %v476, %v525
  %v535 = vmul.f32 %v491, %v527
  %540 = vrot.lane.b32.xlu0 %v532, 32
  %v541 = vpop.permute.xlu0 %540
  %542 = vrot.lane.b32.xlu0 %v533, 32
  %v543 = vpop.permute.xlu0 %542
  %544 = vrot.lane.b32.xlu0 %v534, 32
  %v545 = vpop.permute.xlu0 %544
  %546 = vrot.lane.b32.xlu0 %v535, 32
  %v547 = vpop.permute.xlu0 %546
  %v552 = vadd.f32 %v512, %v541
  %v553 = vadd.f32 %v513, %v543
  %v554 = vadd.f32 %v514, %v545
  %v555 = vadd.f32 %v515, %v547
  %v556 = vtanh.pop %v552
  %v557 = vtanh.pop %v553
  %v558 = vtanh.pop %v554
  %v559 = vtanh.pop %v555
  %564 = vrot.lane.b32.xlu0 %v556, 64
  %v565 = vpop.permute.xlu0 %564
  %566 = vrot.lane.b32.xlu0 %v557, 64
  %v567 = vpop.permute.xlu0 %566
  %568 = vrot.lane.b32.xlu0 %v558, 64
  %v569 = vpop.permute.xlu0 %568
  %570 = vrot.lane.b32.xlu0 %v559, 64
  %v571 = vpop.permute.xlu0 %570
  %v576 = vmul.f32 %v446, %v565
  %v577 = vmul.f32 %v461, %v567
  %v578 = vmul.f32 %v476, %v569
  %v579 = vmul.f32 %v491, %v571
  %584 = vrot.lane.b32.xlu0 %v576, 32
  %v585 = vpop.permute.xlu0 %584
  %586 = vrot.lane.b32.xlu0 %v577, 32
  %v587 = vpop.permute.xlu0 %586
  %588 = vrot.lane.b32.xlu0 %v578, 32
  %v589 = vpop.permute.xlu0 %588
  %590 = vrot.lane.b32.xlu0 %v579, 32
  %v591 = vpop.permute.xlu0 %590
  %v592 = vsel %vm374, %v585, 0
  %v594 = vsel %vm374, %v587, 0
  %v596 = vsel %vm374, %v589, 0
  %v598 = vsel %vm374, %v591, 0
  %600 = vmatpush.msra.mxu0 0.0
  %601 = vmatpush.msra.mxu0 0.0
  %602 = vmatpush.msra.mxu0 0.0
  %603 = vmatpush.msra.mxu0 0.0
  %604 = vmatpush.msra.mxu0 0.0
  %605 = vmatpush.msra.mxu0 0.0
  %606 = vmatpush.msra.mxu0 0.0
  %607 = vmatpush.msra.mxu0 0.0
  %608 = vmatpush.msra.mxu0 0.0
  %609 = vmatpush.msra.mxu0 0.0
  %610 = vmatpush.msra.mxu0 0.0
  %611 = vmatpush.msra.mxu0 0.0
  %612 = vmatpush.msra.mxu0 %v237
  %613 = vmatpush.msra.mxu0 %v236
  %614 = vmatpush.msra.mxu0 %v235
  %615 = vmatpush.msra.mxu0 %v234
  %616 = vmatmul.f32.gmra.mxu0 %v592
  %v617 = vpop.f32.mrf.mxu0
  %v618 = vadd.f32 0.0, %v617
  %619 = vmatmul.f32.gmra.mxu0 %v594
  %v620 = vpop.f32.mrf.mxu0
  %v621 = vadd.f32 0.0, %v620
  %622 = vmatmul.f32.gmra.mxu0 %v596
  %v623 = vpop.f32.mrf.mxu0
  %v624 = vadd.f32 0.0, %v623
  %625 = vmatmul.f32.gmra.mxu0 %v598
  %v626 = vpop.f32.mrf.mxu0
  %v627 = vadd.f32 0.0, %v626
  %628 = vdwg.mxu0
  %v629 = vadd.f32 %v223, %v618
  %v630 = vadd.f32 %v226, %v621
  %v631 = vadd.f32 %v229, %v624
  %v632 = vadd.f32 %v232, %v627
  %v633 = vxor.u32 %v629, 2147483648
  %v634 = vxor.u32 %v630, 2147483648
  %v635 = vxor.u32 %v631, 2147483648
  %v636 = vxor.u32 %v632, 2147483648
  %v637 = vmul.f32 %v633, 1.442695
  %v638 = vpow.pop %v637
  %v639 = vmul.f32 %v634, 1.442695
  %v640 = vpow.pop %v639
  %v641 = vmul.f32 %v635, 1.442695
  %v642 = vpow.pop %v641
  %v643 = vmul.f32 %v636, 1.442695
  %v644 = vpow.pop %v643
  %v645 = vadd.f32 %v638, 1.0
  %v646 = vadd.f32 %v640, 1.0
  %v647 = vadd.f32 %v642, 1.0
  %v648 = vadd.f32 %v644, 1.0
  %v649 = vrcp.pop %v645
  %v650 = vmul.f32 %v645, %v649
  %v651 = vsub.f32 1.0, %v650
  %v652 = vmul.f32 %v649, %v651
  %v653 = vadd.f32 %v649, %v652
  %vm654 = vweird.f32 %v645
  %vm655 = vweird.f32 %v649
  %vm656 = vmor %vm654, %vm655
  %v657 = vsel %vm656, %v649, %v653
  %v658 = vand.u32 2147483647, %v645
  %vm659 = vcmp.eq.f32.partialorder %v658, 8.507059e+37
  %v660 = vand.u32 %v645, 2147483648
  %v661 = vor.u32 1.1754944e-38, %v660
  %v662 = vsel %vm659, %v661, %v657
  %v663 = vmul.f32 1.0, %v662
  %v664 = vrcp.pop %v646
  %v665 = vmul.f32 %v646, %v664
  %v666 = vsub.f32 1.0, %v665
  %v667 = vmul.f32 %v664, %v666
  %v668 = vadd.f32 %v664, %v667
  %vm669 = vweird.f32 %v646
  %vm670 = vweird.f32 %v664
  %vm671 = vmor %vm669, %vm670
  %v672 = vsel %vm671, %v664, %v668
  %v673 = vand.u32 2147483647, %v646
  %vm674 = vcmp.eq.f32.partialorder %v673, 8.507059e+37
  %v675 = vand.u32 %v646, 2147483648
  %v676 = vor.u32 1.1754944e-38, %v675
  %v677 = vsel %vm674, %v676, %v672
  %v678 = vmul.f32 1.0, %v677
  %v679 = vrcp.pop %v647
  %v680 = vmul.f32 %v647, %v679
  %v681 = vsub.f32 1.0, %v680
  %v682 = vmul.f32 %v679, %v681
  %v683 = vadd.f32 %v679, %v682
  %vm684 = vweird.f32 %v647
  %vm685 = vweird.f32 %v679
  %vm686 = vmor %vm684, %vm685
  %v687 = vsel %vm686, %v679, %v683
  %v688 = vand.u32 2147483647, %v647
  %vm689 = vcmp.eq.f32.partialorder %v688, 8.507059e+37
  %v690 = vand.u32 %v647, 2147483648
  %v691 = vor.u32 1.1754944e-38, %v690
  %v692 = vsel %vm689, %v691, %v687
  %v693 = vmul.f32 1.0, %v692
  %v694 = vrcp.pop %v648
  %v695 = vmul.f32 %v648, %v694
  %v696 = vsub.f32 1.0, %v695
  %v697 = vmul.f32 %v694, %v696
  %v698 = vadd.f32 %v694, %v697
  %vm699 = vweird.f32 %v648
  %vm700 = vweird.f32 %v694
  %vm701 = vmor %vm699, %vm700
  %v702 = vsel %vm701, %v694, %v698
  %v703 = vand.u32 2147483647, %v648
  %vm704 = vcmp.eq.f32.partialorder %v703, 8.507059e+37
  %v705 = vand.u32 %v648, 2147483648
  %v706 = vor.u32 1.1754944e-38, %v705
  %v707 = vsel %vm704, %v706, %v702
  %v708 = vmul.f32 1.0, %v707
  %v709 = vtanh.pop %v629
  %v710 = vtanh.pop %v630
  %v711 = vtanh.pop %v631
  %v712 = vtanh.pop %v632
  %v713 = vmul.f32 %v663, %v552
  %v714 = vmul.f32 %v678, %v553
  %v715 = vmul.f32 %v693, %v554
  %v716 = vmul.f32 %v708, %v555
  %721 = vrot.lane.b32.xlu0 %v709, 64
  %v722 = vpop.permute.xlu0 %721
  %723 = vrot.lane.b32.xlu0 %v710, 64
  %v724 = vpop.permute.xlu0 %723
  %725 = vrot.lane.b32.xlu0 %v711, 64
  %v726 = vpop.permute.xlu0 %725
  %727 = vrot.lane.b32.xlu0 %v712, 64
  %v728 = vpop.permute.xlu0 %727
  %v733 = vmul.f32 %v663, %v722
  %v734 = vmul.f32 %v678, %v724
  %v735 = vmul.f32 %v693, %v726
  %v736 = vmul.f32 %v708, %v728
  %741 = vrot.lane.b32.xlu0 %v733, 32
  %v742 = vpop.permute.xlu0 %741
  %743 = vrot.lane.b32.xlu0 %v734, 32
  %v744 = vpop.permute.xlu0 %743
  %745 = vrot.lane.b32.xlu0 %v735, 32
  %v746 = vpop.permute.xlu0 %745
  %747 = vrot.lane.b32.xlu0 %v736, 32
  %v748 = vpop.permute.xlu0 %747
  %v753 = vadd.f32 %v713, %v742
  %v754 = vadd.f32 %v714, %v744
  %v755 = vadd.f32 %v715, %v746
  %v756 = vadd.f32 %v716, %v748
  %v757 = vtanh.pop %v753
  %v758 = vtanh.pop %v754
  %v759 = vtanh.pop %v755
  %v760 = vtanh.pop %v756
  %765 = vrot.lane.b32.xlu0 %v757, 64
  %v766 = vpop.permute.xlu0 %765
  %767 = vrot.lane.b32.xlu0 %v758, 64
  %v768 = vpop.permute.xlu0 %767
  %769 = vrot.lane.b32.xlu0 %v759, 64
  %v770 = vpop.permute.xlu0 %769
  %771 = vrot.lane.b32.xlu0 %v760, 64
  %v772 = vpop.permute.xlu0 %771
  %v777 = vmul.f32 %v663, %v766
  %v778 = vmul.f32 %v678, %v768
  %v779 = vmul.f32 %v693, %v770
  %v780 = vmul.f32 %v708, %v772
  %v781 = vld [vmem:[%s9] sm:$0xff]
  %v782 = vld [vmem:[%s9 + $0x8] sm:$0xff]
  %v783 = vld [vmem:[%s9 + $0x10] sm:$0xff]
  %v784 = vld [vmem:[%s9 + $0x18] sm:$0xff]
  %v785 = vld [vmem:[%s11] sm:$0x1]
  %v787 = vperm.slane %v785, 0
  %793 = vrot.lane.b32.xlu0 %v777, 32
  %v794 = vpop.permute.xlu0 %793
  %795 = vrot.lane.b32.xlu0 %v778, 32
  %v796 = vpop.permute.xlu0 %795
  %797 = vrot.lane.b32.xlu0 %v779, 32
  %v798 = vpop.permute.xlu0 %797
  %799 = vrot.lane.b32.xlu0 %v780, 32
  %v800 = vpop.permute.xlu0 %799
  %v801 = vsel %vm374, %v794, 0
  %v803 = vsel %vm374, %v796, 0
  %v805 = vsel %vm374, %v798, 0
  %v807 = vsel %vm374, %v800, 0
  %809 = vmatpush.msra.mxu0 0.0
  %810 = vmatpush.msra.mxu0 0.0
  %811 = vmatpush.msra.mxu0 0.0
  %812 = vmatpush.msra.mxu0 0.0
  %813 = vmatpush.msra.mxu0 0.0
  %814 = vmatpush.msra.mxu0 0.0
  %815 = vmatpush.msra.mxu0 0.0
  %816 = vmatpush.msra.mxu0 0.0
  %817 = vmatpush.msra.mxu0 0.0
  %818 = vmatpush.msra.mxu0 0.0
  %819 = vmatpush.msra.mxu0 0.0
  %820 = vmatpush.msra.mxu0 0.0
  %821 = vmatpush.msra.mxu0 %v784
  %822 = vmatpush.msra.mxu0 %v783
  %823 = vmatpush.msra.mxu0 %v782
  %824 = vmatpush.msra.mxu0 %v781
  %825 = vmatmul.f32.gmra.mxu0 %v801
  %v826 = vpop.f32.mrf.mxu0
  %v827 = vadd.f32 %v787, %v826
  %828 = vmatmul.f32.gmra.mxu0 %v803
  %v829 = vpop.f32.mrf.mxu0
  %v830 = vadd.f32 %v787, %v829
  %831 = vmatmul.f32.gmra.mxu0 %v805
  %v832 = vpop.f32.mrf.mxu0
  %v833 = vadd.f32 %v787, %v832
  %834 = vmatmul.f32.gmra.mxu0 %v807
  %v835 = vpop.f32.mrf.mxu0
  %v836 = vadd.f32 %v787, %v835
  %837 = vdwg.mxu0
  %v838 = vmax.f32 %v827, 0.0
  %v839 = vmax.f32 %v830, 0.0
  %v840 = vmax.f32 %v833, 0.0
  %v841 = vmax.f32 %v836, 0.0
  %v842 = vadd.f32 %v838, %v840
  %v843 = vadd.f32 %v839, %v841
  %v844 = vmul.f32 %v842, 0.5
  %v845 = vmul.f32 %v843, 0.5
  %v846 = vld [vmem:[%s13] sm:$0x1]
  %v847 = vld [vmem:[%s15] sm:$0x1]
  %v848 = vsel %vm374, %v844, 0.0
  %v849 = vsel %vm374, %v845, 0.0
  %v850 = vadd.f32 %v848, %v849
  %v851 = vrot.slane %v850, 4
  %v852 = vadd.f32 %v850, %v851
  %v853 = vrot.slane %v852, 2
  %v854 = vadd.f32 %v852, %v853
  %v855 = vrot.slane %v854, 1
  %v856 = vadd.f32 %v854, %v855
  %v857 = vrcp.pop 16.0
  %v858 = vmul.f32 16.0, %v857
  %v859 = vsub.f32 1.0, %v858
  %v860 = vmul.f32 %v857, %v859
  %v861 = vadd.f32 %v857, %v860
  %vm862 = vweird.f32 %v857
  %v863 = vsel %vm862, %v857, %v861
  %v864 = vmul.f32 %v856, %v863
  %v865 = vsub.f32 %v844, %v864
  %v866 = vsub.f32 %v845, %v864
  %v867 = vmul.f32 %v865, %v865
  %v868 = vmul.f32 %v866, %v866
  %v869 = vsel %vm374, %v867, 0.0
  %v870 = vsel %vm374, %v868, 0.0
  %v871 = vadd.f32 %v869, %v870
  %v872 = vrot.slane %v871, 4
  %v873 = vadd.f32 %v871, %v872
  %v874 = vrot.slane %v873, 2
  %v875 = vadd.f32 %v873, %v874
  %v876 = vrot.slane %v875, 1
  %v877 = vadd.f32 %v875, %v876
  %v878 = vmul.f32 %v877, %v863
  %v879 = vadd.f32 %v878, 1e-05
  %v880 = vrsqrt.pop %v879
  %v881 = vmul.f32 %v880, %v879
  %v882 = vmul.f32 %v881, %v880
  %v883 = vmul.f32 0.5, %v882
  %v884 = vsub.f32 1.5, %v883
  %v885 = vmul.f32 %v880, %v884
  %vm886 = vweird.f32 %v879
  %vm887 = vweird.f32 %v880
  %vm888 = vmor %vm886, %vm887
  %v889 = vsel %vm888, %v880, %v885
  %v890 = vmul.f32 %v866, %v889
  %v892 = vperm.slane %v846, 0
  %v894 = vmul.f32 %v890, %v892
  %v896 = vperm.slane %v847, 0
  %v898 = vadd.f32 %v894, %v896
  %v899 = vld [vmem:[%s17] sm:$0xff]
  %v900 = vld [vmem:[%s17 + $0x8] sm:$0xff]
  %v901 = vld [vmem:[%s17 + $0x10] sm:$0xff]
  %v902 = vld [vmem:[%s17 + $0x18] sm:$0xff]
  %v903 = vld [vmem:[%s17 + $0x20] sm:$0xff]
  %v904 = vld [vmem:[%s17 + $0x28] sm:$0xff]
  %v905 = vld [vmem:[%s17 + $0x30] sm:$0xff]
  %v906 = vld [vmem:[%s17 + $0x38] sm:$0xff]
  %v907 = vld [vmem:[%s19] sm:$0xff]
  %v908 = vld [vmem:[%s19 + $0x8] sm:$0xff]
  %v909 = vld [vmem:[%s19 + $0x10] sm:$0xff]
  %v910 = vld [vmem:[%s19 + $0x18] sm:$0xff]
  %v911 = vld [vmem:[%s19 + $0x20] sm:$0xff]
  %v912 = vld [vmem:[%s19 + $0x28] sm:$0xff]
  %v913 = vld [vmem:[%s19 + $0x30] sm:$0xff]
  %v914 = vld [vmem:[%s19 + $0x38] sm:$0xff]
  %v915 = vld [vmem:[%s19 + $0x40] sm:$0xff]
  %v916 = vld [vmem:[%s19 + $0x48] sm:$0xff]
  %v917 = vld [vmem:[%s19 + $0x50] sm:$0xff]
  %v918 = vld [vmem:[%s19 + $0x58] sm:$0xff]
  %v919 = vld [vmem:[%s19 + $0x60] sm:$0xff]
  %v920 = vld [vmem:[%s19 + $0x68] sm:$0xff]
  %v921 = vld [vmem:[%s19 + $0x70] sm:$0xff]
  %v922 = vld [vmem:[%s19 + $0x78] sm:$0xff]
  %v923 = vld [vmem:[%s19 + $0x80] sm:$0xff]
  %v924 = vld [vmem:[%s19 + $0x88] sm:$0xff]
  %v925 = vld [vmem:[%s19 + $0x90] sm:$0xff]
  %v926 = vld [vmem:[%s19 + $0x98] sm:$0xff]
  %v927 = vld [vmem:[%s19 + $0xa0] sm:$0xff]
  %v928 = vld [vmem:[%s19 + $0xa8] sm:$0xff]
  %v929 = vld [vmem:[%s19 + $0xb0] sm:$0xff]
  %v930 = vld [vmem:[%s19 + $0xb8] sm:$0xff]
  %v931 = vld [vmem:[%s19 + $0xc0] sm:$0xff]
  %v932 = vld [vmem:[%s19 + $0xc8] sm:$0xff]
  %v933 = vld [vmem:[%s19 + $0xd0] sm:$0xff]
  %v934 = vld [vmem:[%s19 + $0xd8] sm:$0xff]
  %v935 = vld [vmem:[%s19 + $0xe0] sm:$0xff]
  %v936 = vld [vmem:[%s19 + $0xe8] sm:$0xff]
  %v937 = vld [vmem:[%s19 + $0xf0] sm:$0xff]
  %v938 = vld [vmem:[%s19 + $0xf8] sm:$0xff]
  %v939 = vld [vmem:[%s19 + $0x100] sm:$0xff]
  %v940 = vld [vmem:[%s19 + $0x108] sm:$0xff]
  %v941 = vld [vmem:[%s19 + $0x110] sm:$0xff]
  %v942 = vld [vmem:[%s19 + $0x118] sm:$0xff]
  %v943 = vld [vmem:[%s19 + $0x120] sm:$0xff]
  %v944 = vld [vmem:[%s19 + $0x128] sm:$0xff]
  %v945 = vld [vmem:[%s19 + $0x130] sm:$0xff]
  %v946 = vld [vmem:[%s19 + $0x138] sm:$0xff]
  %v947 = vld [vmem:[%s19 + $0x140] sm:$0xff]
  %v948 = vld [vmem:[%s19 + $0x148] sm:$0xff]
  %v949 = vld [vmem:[%s19 + $0x150] sm:$0xff]
  %v950 = vld [vmem:[%s19 + $0x158] sm:$0xff]
  %v951 = vld [vmem:[%s19 + $0x160] sm:$0xff]
  %v952 = vld [vmem:[%s19 + $0x168] sm:$0xff]
  %v953 = vld [vmem:[%s19 + $0x170] sm:$0xff]
  %v954 = vld [vmem:[%s19 + $0x178] sm:$0xff]
  %v955 = vld [vmem:[%s19 + $0x180] sm:$0xff]
  %v956 = vld [vmem:[%s19 + $0x188] sm:$0xff]
  %v957 = vld [vmem:[%s19 + $0x190] sm:$0xff]
  %v958 = vld [vmem:[%s19 + $0x198] sm:$0xff]
  %v959 = vld [vmem:[%s19 + $0x1a0] sm:$0xff]
  %v960 = vld [vmem:[%s19 + $0x1a8] sm:$0xff]
  %v961 = vld [vmem:[%s19 + $0x1b0] sm:$0xff]
  %v962 = vld [vmem:[%s19 + $0x1b8] sm:$0xff]
  %v963 = vld [vmem:[%s19 + $0x1c0] sm:$0xff]
  %v964 = vld [vmem:[%s19 + $0x1c8] sm:$0xff]
  %v965 = vld [vmem:[%s19 + $0x1d0] sm:$0xff]
  %v966 = vld [vmem:[%s19 + $0x1d8] sm:$0xff]
  %v967 = vld [vmem:[%s19 + $0x1e0] sm:$0xff]
  %v968 = vld [vmem:[%s19 + $0x1e8] sm:$0xff]
  %v969 = vld [vmem:[%s19 + $0x1f0] sm:$0xff]
  %v970 = vld [vmem:[%s19 + $0x1f8] sm:$0xff]
  %v971 = vld [vmem:[%s19 + $0x200] sm:$0xff]
  %v972 = vld [vmem:[%s19 + $0x208] sm:$0xff]
  %v973 = vld [vmem:[%s19 + $0x210] sm:$0xff]
  %v974 = vld [vmem:[%s19 + $0x218] sm:$0xff]
  %v975 = vld [vmem:[%s19 + $0x220] sm:$0xff]
  %v976 = vld [vmem:[%s19 + $0x228] sm:$0xff]
  %v977 = vld [vmem:[%s19 + $0x230] sm:$0xff]
  %v978 = vld [vmem:[%s19 + $0x238] sm:$0xff]
  %v979 = vld [vmem:[%s19 + $0x240] sm:$0xff]
  %v980 = vld [vmem:[%s19 + $0x248] sm:$0xff]
  %v981 = vld [vmem:[%s19 + $0x250] sm:$0xff]
  %v982 = vld [vmem:[%s19 + $0x258] sm:$0xff]
  %v983 = vld [vmem:[%s19 + $0x260] sm:$0xff]
  %v984 = vld [vmem:[%s19 + $0x268] sm:$0xff]
  %v985 = vld [vmem:[%s19 + $0x270] sm:$0xff]
  %v986 = vld [vmem:[%s19 + $0x278] sm:$0xff]
  %v987 = vld [vmem:[%s19 + $0x280] sm:$0xff]
  %v988 = vld [vmem:[%s19 + $0x288] sm:$0xff]
  %v989 = vld [vmem:[%s19 + $0x290] sm:$0xff]
  %v990 = vld [vmem:[%s19 + $0x298] sm:$0xff]
  %v991 = vld [vmem:[%s19 + $0x2a0] sm:$0xff]
  %v992 = vld [vmem:[%s19 + $0x2a8] sm:$0xff]
  %v993 = vld [vmem:[%s19 + $0x2b0] sm:$0xff]
  %v994 = vld [vmem:[%s19 + $0x2b8] sm:$0xff]
  %v995 = vld [vmem:[%s19 + $0x2c0] sm:$0xff]
  %v996 = vld [vmem:[%s19 + $0x2c8] sm:$0xff]
  %v997 = vld [vmem:[%s19 + $0x2d0] sm:$0xff]
  %v998 = vld [vmem:[%s19 + $0x2d8] sm:$0xff]
  %v999 = vld [vmem:[%s19 + $0x2e0] sm:$0xff]
  %v1000 = vld [vmem:[%s19 + $0x2e8] sm:$0xff]
  %v1001 = vld [vmem:[%s19 + $0x2f0] sm:$0xff]
  %v1002 = vld [vmem:[%s19 + $0x2f8] sm:$0xff]
  %v1003 = vld [vmem:[%s19 + $0x300] sm:$0xff]
  %v1004 = vld [vmem:[%s19 + $0x308] sm:$0xff]
  %v1005 = vld [vmem:[%s19 + $0x310] sm:$0xff]
  %v1006 = vld [vmem:[%s19 + $0x318] sm:$0xff]
  %v1007 = vld [vmem:[%s19 + $0x320] sm:$0xff]
  %v1008 = vld [vmem:[%s19 + $0x328] sm:$0xff]
  %v1009 = vld [vmem:[%s19 + $0x330] sm:$0xff]
  %v1010 = vld [vmem:[%s19 + $0x338] sm:$0xff]
  %v1011 = vld [vmem:[%s19 + $0x340] sm:$0xff]
  %v1012 = vld [vmem:[%s19 + $0x348] sm:$0xff]
  %v1013 = vld [vmem:[%s19 + $0x350] sm:$0xff]
  %v1014 = vld [vmem:[%s19 + $0x358] sm:$0xff]
  %v1015 = vld [vmem:[%s19 + $0x360] sm:$0xff]
  %v1016 = vld [vmem:[%s19 + $0x368] sm:$0xff]
  %v1017 = vld [vmem:[%s19 + $0x370] sm:$0xff]
  %v1018 = vld [vmem:[%s19 + $0x378] sm:$0xff]
  %v1019 = vld [vmem:[%s19 + $0x380] sm:$0xff]
  %v1020 = vld [vmem:[%s19 + $0x388] sm:$0xff]
  %v1021 = vld [vmem:[%s19 + $0x390] sm:$0xff]
  %v1022 = vld [vmem:[%s19 + $0x398] sm:$0xff]
  %v1023 = vld [vmem:[%s19 + $0x3a0] sm:$0xff]
  %v1024 = vld [vmem:[%s19 + $0x3a8] sm:$0xff]
  %v1025 = vld [vmem:[%s19 + $0x3b0] sm:$0xff]
  %v1026 = vld [vmem:[%s19 + $0x3b8] sm:$0xff]
  %v1027 = vld [vmem:[%s19 + $0x3c0] sm:$0xff]
  %v1028 = vld [vmem:[%s19 + $0x3c8] sm:$0xff]
  %v1029 = vld [vmem:[%s19 + $0x3d0] sm:$0xff]
  %v1030 = vld [vmem:[%s19 + $0x3d8] sm:$0xff]
  %v1031 = vld [vmem:[%s19 + $0x3e0] sm:$0xff]
  %v1032 = vld [vmem:[%s21] sm:$0x1]
  %v1034 = vperm.slane %v1032, 0
  %vm1036 = vcmask 850944
  %v1038 = vsel %vm1036, %v906, 0
  %1040 = vmatpush.msra.mxu0 %v922
  %1041 = vmatpush.msra.mxu0 %v921
  %1042 = vmatpush.msra.mxu0 %v920
  %1043 = vmatpush.msra.mxu0 %v919
  %1044 = vmatpush.msra.mxu0 %v918
  %1045 = vmatpush.msra.mxu0 %v917
  %1046 = vmatpush.msra.mxu0 %v916
  %1047 = vmatpush.msra.mxu0 %v915
  %1048 = vmatpush.msra.mxu0 %v914
  %1049 = vmatpush.msra.mxu0 %v913
  %1050 = vmatpush.msra.mxu0 %v912
  %1051 = vmatpush.msra.mxu0 %v911
  %1052 = vmatpush.msra.mxu0 %v910
  %1053 = vmatpush.msra.mxu0 %v909
  %1054 = vmatpush.msra.mxu0 %v908
  %1055 = vmatpush.msra.mxu0 %v907
  %1056 = vmatmul.f32.gmra.mxu0 %v899
  %v1057 = vpop.f32.mrf.mxu0
  %v1058 = vadd.f32 %v1034, %v1057
  %1059 = vdwg.mxu0
  %1060 = vmatpush.msra.mxu0 %v938
  %1061 = vmatpush.msra.mxu0 %v937
  %1062 = vmatpush.msra.mxu0 %v936
  %1063 = vmatpush.msra.mxu0 %v935
  %1064 = vmatpush.msra.mxu0 %v934
  %1065 = vmatpush.msra.mxu0 %v933
  %1066 = vmatpush.msra.mxu0 %v932
  %1067 = vmatpush.msra.mxu0 %v931
  %1068 = vmatpush.msra.mxu0 %v930
  %1069 = vmatpush.msra.mxu0 %v929
  %1070 = vmatpush.msra.mxu0 %v928
  %1071 = vmatpush.msra.mxu0 %v927
  %1072 = vmatpush.msra.mxu0 %v926
  %1073 = vmatpush.msra.mxu0 %v925
  %1074 = vmatpush.msra.mxu0 %v924
  %1075 = vmatpush.msra.mxu0 %v923
  %1076 = vmatmul.f32.gmra.mxu0 %v900
  %v1077 = vpop.f32.mrf.mxu0
  %v1078 = vadd.f32 %v1058, %v1077
  %1079 = vdwg.mxu0
  %1080 = vmatpush.msra.mxu0 %v954
  %1081 = vmatpush.msra.mxu0 %v953
  %1082 = vmatpush.msra.mxu0 %v952
  %1083 = vmatpush.msra.mxu0 %v951
  %1084 = vmatpush.msra.mxu0 %v950
  %1085 = vmatpush.msra.mxu0 %v949
  %1086 = vmatpush.msra.mxu0 %v948
  %1087 = vmatpush.msra.mxu0 %v947
  %1088 = vmatpush.msra.mxu0 %v946
  %1089 = vmatpush.msra.mxu0 %v945
  %1090 = vmatpush.msra.mxu0 %v944
  %1091 = vmatpush.msra.mxu0 %v943
  %1092 = vmatpush.msra.mxu0 %v942
  %1093 = vmatpush.msra.mxu0 %v941
  %1094 = vmatpush.msra.mxu0 %v940
  %1095 = vmatpush.msra.mxu0 %v939
  %1096 = vmatmul.f32.gmra.mxu0 %v901
  %v1097 = vpop.f32.mrf.mxu0
  %v1098 = vadd.f32 %v1078, %v1097
  %1099 = vdwg.mxu0
  %1100 = vmatpush.msra.mxu0 %v970
  %1101 = vmatpush.msra.mxu0 %v969
  %1102 = vmatpush.msra.mxu0 %v968
  %1103 = vmatpush.msra.mxu0 %v967
  %1104 = vmatpush.msra.mxu0 %v966
  %1105 = vmatpush.msra.mxu0 %v965
  %1106 = vmatpush.msra.mxu0 %v964
  %1107 = vmatpush.msra.mxu0 %v963
  %1108 = vmatpush.msra.mxu0 %v962
  %1109 = vmatpush.msra.mxu0 %v961
  %1110 = vmatpush.msra.mxu0 %v960
  %1111 = vmatpush.msra.mxu0 %v959
  %1112 = vmatpush.msra.mxu0 %v958
  %1113 = vmatpush.msra.mxu0 %v957
  %1114 = vmatpush.msra.mxu0 %v956
  %1115 = vmatpush.msra.mxu0 %v955
  %1116 = vmatmul.f32.gmra.mxu0 %v902
  %v1117 = vpop.f32.mrf.mxu0
  %v1118 = vadd.f32 %v1098, %v1117
  %1119 = vdwg.mxu0
  %1120 = vmatpush.msra.mxu0 %v986
  %1121 = vmatpush.msra.mxu0 %v985
  %1122 = vmatpush.msra.mxu0 %v984
  %1123 = vmatpush.msra.mxu0 %v983
  %1124 = vmatpush.msra.mxu0 %v982
  %1125 = vmatpush.msra.mxu0 %v981
  %1126 = vmatpush.msra.mxu0 %v980
  %1127 = vmatpush.msra.mxu0 %v979
  %1128 = vmatpush.msra.mxu0 %v978
  %1129 = vmatpush.msra.mxu0 %v977
  %1130 = vmatpush.msra.mxu0 %v976
  %1131 = vmatpush.msra.mxu0 %v975
  %1132 = vmatpush.msra.mxu0 %v974
  %1133 = vmatpush.msra.mxu0 %v973
  %1134 = vmatpush.msra.mxu0 %v972
  %1135 = vmatpush.msra.mxu0 %v971
  %1136 = vmatmul.f32.gmra.mxu0 %v903
  %v1137 = vpop.f32.mrf.mxu0
  %v1138 = vadd.f32 %v1118, %v1137
  %1139 = vdwg.mxu0
  %1140 = vmatpush.msra.mxu0 %v1002
  %1141 = vmatpush.msra.mxu0 %v1001
  %1142 = vmatpush.msra.mxu0 %v1000
  %1143 = vmatpush.msra.mxu0 %v999
  %1144 = vmatpush.msra.mxu0 %v998
  %1145 = vmatpush.msra.mxu0 %v997
  %1146 = vmatpush.msra.mxu0 %v996
  %1147 = vmatpush.msra.mxu0 %v995
  %1148 = vmatpush.msra.mxu0 %v994
  %1149 = vmatpush.msra.mxu0 %v993
  %1150 = vmatpush.msra.mxu0 %v992
  %1151 = vmatpush.msra.mxu0 %v991
  %1152 = vmatpush.msra.mxu0 %v990
  %1153 = vmatpush.msra.mxu0 %v989
  %1154 = vmatpush.msra.mxu0 %v988
  %1155 = vmatpush.msra.mxu0 %v987
  %1156 = vmatmul.f32.gmra.mxu0 %v904
  %v1157 = vpop.f32.mrf.mxu0
  %v1158 = vadd.f32 %v1138, %v1157
  %1159 = vdwg.mxu0
  %1160 = vmatpush.msra.mxu0 %v1018
  %1161 = vmatpush.msra.mxu0 %v1017
  %1162 = vmatpush.msra.mxu0 %v1016
  %1163 = vmatpush.msra.mxu0 %v1015
  %1164 = vmatpush.msra.mxu0 %v1014
  %1165 = vmatpush.msra.mxu0 %v1013
  %1166 = vmatpush.msra.mxu0 %v1012
  %1167 = vmatpush.msra.mxu0 %v1011
  %1168 = vmatpush.msra.mxu0 %v1010
  %1169 = vmatpush.msra.mxu0 %v1009
  %1170 = vmatpush.msra.mxu0 %v1008
  %1171 = vmatpush.msra.mxu0 %v1007
  %1172 = vmatpush.msra.mxu0 %v1006
  %1173 = vmatpush.msra.mxu0 %v1005
  %1174 = vmatpush.msra.mxu0 %v1004
  %1175 = vmatpush.msra.mxu0 %v1003
  %1176 = vmatmul.f32.gmra.mxu0 %v905
  %v1177 = vpop.f32.mrf.mxu0
  %v1178 = vadd.f32 %v1158, %v1177
  %1179 = vdwg.mxu0
  %1180 = vmatpush.msra.mxu0 0.0
  %1181 = vmatpush.msra.mxu0 0.0
  %1182 = vmatpush.msra.mxu0 0.0
  %1183 = vmatpush.msra.mxu0 %v1031
  %1184 = vmatpush.msra.mxu0 %v1030
  %1185 = vmatpush.msra.mxu0 %v1029
  %1186 = vmatpush.msra.mxu0 %v1028
  %1187 = vmatpush.msra.mxu0 %v1027
  %1188 = vmatpush.msra.mxu0 %v1026
  %1189 = vmatpush.msra.mxu0 %v1025
  %1190 = vmatpush.msra.mxu0 %v1024
  %1191 = vmatpush.msra.mxu0 %v1023
  %1192 = vmatpush.msra.mxu0 %v1022
  %1193 = vmatpush.msra.mxu0 %v1021
  %1194 = vmatpush.msra.mxu0 %v1020
  %1195 = vmatpush.msra.mxu0 %v1019
  %1196 = vmatmul.f32.gmra.mxu0 %v1038
  %v1197 = vpop.f32.mrf.mxu0
  %v1198 = vadd.f32 %v1178, %v1197
  %1199 = vdwg.mxu0
  %v1200 = vmax.f32 %v1198, 0.0
  %v1201 = vld [vmem:[%s23] sm:$0xff]
  %1203 = vset.pattern.permute.xlu0 0
  %1204 = vperm.xlu0 %1203, %v1201
  %v1205 = vpop.permute.xlu0 %1204
  %v1207 = vmul.f32 %v1200, %v1205
  %v1208 = vld [vmem:[%s25] sm:$0xff]
  %v1209 = vld [vmem:[%s29] sm:$0xff]
  %v1210 = vld [vmem:[%s29 + $0x8] sm:$0x7f]
  %v1211 = vld [vmem:[%s27] sm:$0xff]
  %v1212 = vld [vmem:[%s31] sm:$0xff]
  %v1213 = vld [vmem:[%s31 + $0x8] sm:$0xff]
  %v1214 = vld [vmem:[%s31 + $0x10] sm:$0xff]
  %v1215 = vld [vmem:[%s31 + $0x18] sm:$0xff]
  %v1216 = vld [vmem:[%s31 + $0x20] sm:$0xff]
  %v1217 = vld [vmem:[%s31 + $0x28] sm:$0xff]
  %v1218 = vld [vmem:[%s31 + $0x30] sm:$0xff]
  %v1219 = vld [vmem:[%s31 + $0x38] sm:$0xff]
  %v1220 = vld [vmem:[%s31 + $0x40] sm:$0xff]
  %v1221 = vld [vmem:[%s31 + $0x48] sm:$0xff]
  %v1222 = vld [vmem:[%s31 + $0x50] sm:$0xff]
  %v1223 = vld [vmem:[%s31 + $0x58] sm:$0xff]
  %v1224 = vld [vmem:[%s31 + $0x60] sm:$0xff]
  %v1225 = vld [vmem:[%s31 + $0x68] sm:$0xf]
  %vm1226 = vcmask 883712
  %v1228 = vsel %vm1226, %v1211, 0
  %vm1230 = vcmask 1043456
  %v1232 = vsel %vm1230, %v1225, 0
  %1234 = vmatpush.msra.mxu0 0.0
  %1235 = vmatpush.msra.mxu0 0.0
  %1236 = vmatpush.msra.mxu0 %v1232
  %1237 = vmatpush.msra.mxu0 %v1224
  %1238 = vmatpush.msra.mxu0 %v1223
  %1239 = vmatpush.msra.mxu0 %v1222
  %1240 = vmatpush.msra.mxu0 %v1221
  %1241 = vmatpush.msra.mxu0 %v1220
  %1242 = vmatpush.msra.mxu0 %v1219
  %1243 = vmatpush.msra.mxu0 %v1218
  %1244 = vmatpush.msra.mxu0 %v1217
  %1245 = vmatpush.msra.mxu0 %v1216
  %1246 = vmatpush.msra.mxu0 %v1215
  %1247 = vmatpush.msra.mxu0 %v1214
  %1248 = vmatpush.msra.mxu0 %v1213
  %1249 = vmatpush.msra.mxu0 %v1212
  %1250 = vmatmul.f32.gmra.mxu0 %v1228
  %v1251 = vpop.f32.mrf.mxu0
  %v1252 = vadd.f32 0.0, %v1251
  %1253 = vdwg.mxu0
  %vm1254 = vcmask 121856
  %v1256 = vsel %vm1254, %v1208, 0
  %vm1258 = vcmask 1046528
  %v1260 = vsel %vm1258, %v1210, 0
  %1262 = vmatpush.msra.mxu0 0.0
  %1263 = vmatpush.msra.mxu0 0.0
  %1264 = vmatpush.msra.mxu0 0.0
  %1265 = vmatpush.msra.mxu0 0.0
  %1266 = vmatpush.msra.mxu0 0.0
  %1267 = vmatpush.msra.mxu0 0.0
  %1268 = vmatpush.msra.mxu0 0.0
  %1269 = vmatpush.msra.mxu0 0.0
  %1270 = vmatpush.msra.mxu0 0.0
  %1271 = vmatpush.msra.mxu0 0.0
  %1272 = vmatpush.msra.mxu0 0.0
  %1273 = vmatpush.msra.mxu0 0.0
  %1274 = vmatpush.msra.mxu0 0.0
  %1275 = vmatpush.msra.mxu0 0.0
  %1276 = vmatpush.msra.mxu0 %v1260
  %1277 = vmatpush.msra.mxu0 %v1209
  %1278 = vmatmul.f32.gmra.mxu0 %v1256
  %v1279 = vpop.f32.mrf.mxu0
  %v1280 = vadd.f32 %v1252, %v1279
  %1281 = vdwg.mxu0
  %v1282 = vld [vmem:[%s33] sm:$0xff]
  %v1283 = vld [vmem:[%s33 + $0x8] sm:$0xff]
  %v1284 = vld [vmem:[%s33 + $0x10] sm:$0xff]
  %v1285 = vld [vmem:[%s33 + $0x18] sm:$0xff]
  %v1287 = vsel %vm374, %v898, 0
  %1289 = vmatpush.msra.mxu0 0.0
  %1290 = vmatpush.msra.mxu0 0.0
  %1291 = vmatpush.msra.mxu0 0.0
  %1292 = vmatpush.msra.mxu0 0.0
  %1293 = vmatpush.msra.mxu0 0.0
  %1294 = vmatpush.msra.mxu0 0.0
  %1295 = vmatpush.msra.mxu0 0.0
  %1296 = vmatpush.msra.mxu0 0.0
  %1297 = vmatpush.msra.mxu0 0.0
  %1298 = vmatpush.msra.mxu0 0.0
  %1299 = vmatpush.msra.mxu0 0.0
  %1300 = vmatpush.msra.mxu0 0.0
  %1301 = vmatpush.msra.mxu0 %v1285
  %1302 = vmatpush.msra.mxu0 %v1284
  %1303 = vmatpush.msra.mxu0 %v1283
  %1304 = vmatpush.msra.mxu0 %v1282
  %1305 = vmatmul.f32.gmra.mxu0 %v1287
  %v1306 = vpop.f32.mrf.mxu0
  %v1307 = vadd.f32 0.0, %v1306
  %1308 = vdwg.mxu0
  %v1309 = vadd.f32 %v1280, %v1307
  %v1310 = vld [vmem:[%s35] sm:$0xff]
  %v1311 = vld [vmem:[%s35 + $0x8] sm:$0xff]
  %v1312 = vld [vmem:[%s35 + $0x10] sm:$0xff]
  %v1313 = vld [vmem:[%s35 + $0x18] sm:$0xff]
  %v1315 = vsel %vm374, %v1207, 0
  %1317 = vmatpush.msra.mxu0 0.0
  %1318 = vmatpush.msra.mxu0 0.0
  %1319 = vmatpush.msra.mxu0 0.0
  %1320 = vmatpush.msra.mxu0 0.0
  %1321 = vmatpush.msra.mxu0 0.0
  %1322 = vmatpush.msra.mxu0 0.0
  %1323 = vmatpush.msra.mxu0 0.0
  %1324 = vmatpush.msra.mxu0 0.0
  %1325 = vmatpush.msra.mxu0 0.0
  %1326 = vmatpush.msra.mxu0 0.0
  %1327 = vmatpush.msra.mxu0 0.0
  %1328 = vmatpush.msra.mxu0 0.0
  %1329 = vmatpush.msra.mxu0 %v1313
  %1330 = vmatpush.msra.mxu0 %v1312
  %1331 = vmatpush.msra.mxu0 %v1311
  %1332 = vmatpush.msra.mxu0 %v1310
  %1333 = vmatmul.f32.gmra.mxu0 %v1315
  %v1334 = vpop.f32.mrf.mxu0
  %v1335 = vadd.f32 0.0, %v1334
  %1336 = vdwg.mxu0
  %v1337 = vadd.f32 %v1309, %v1335
  %v1338 = vld [vmem:[%s37] sm:$0x1]
  %v1340 = vperm.slane %v1338, 0
  %v1342 = vadd.f32 %v1337, %v1340
  %v1343 = vxor.u32 %v1342, 2147483648
  %v1344 = vmul.f32 %v1343, 1.442695
  %v1345 = vpow.pop %v1344
  %v1346 = vadd.f32 %v1345, 1.0
  %v1347 = vrcp.pop %v1346
  %v1348 = vmul.f32 %v1346, %v1347
  %v1349 = vsub.f32 1.0, %v1348
  %v1350 = vmul.f32 %v1347, %v1349
  %v1351 = vadd.f32 %v1347, %v1350
  %vm1352 = vweird.f32 %v1346
  %vm1353 = vweird.f32 %v1347
  %vm1354 = vmor %vm1352, %vm1353
  %v1355 = vsel %vm1354, %v1347, %v1351
  %v1356 = vand.u32 2147483647, %v1346
  %vm1357 = vcmp.eq.f32.partialorder %v1356, 8.507059e+37
  %v1358 = vand.u32 %v1346, 2147483648
  %v1359 = vor.u32 1.1754944e-38, %v1358
  %v1360 = vsel %vm1357, %v1359, %v1355
  %v1361 = vmul.f32 1.0, %v1360
  %v1362 = vtanh.pop %v1342
  %1364 = vrot.lane.b32.xlu0 %v1362, 64
  %v1365 = vpop.permute.xlu0 %1364
  %v1367 = vmul.f32 %v1361, %v1365
  %v1368 = vtanh.pop %v1367
  %1370 = vrot.lane.b32.xlu0 %v1368, 96
  %v1371 = vpop.permute.xlu0 %1370
  %v1373 = vmul.f32 %v1361, %v1371
  %v1374 = vld [vmem:[%s39] sm:$0x1]
  %v1375 = vld [vmem:[%s41] sm:$0x1]
  %vm1376 = vcmask 1048320
  %v1377 = vsel %vm1376, %v1373, 0.0
  %v1378 = vrot.slane %v1377, 4
  %v1379 = vadd.f32 %v1377, %v1378
  %v1380 = vrot.slane %v1379, 2
  %v1381 = vadd.f32 %v1379, %v1380
  %v1382 = vrot.slane %v1381, 1
  %v1383 = vadd.f32 %v1381, %v1382
  %v1384 = vrcp.pop 8.0
  %v1385 = vmul.f32 8.0, %v1384
  %v1386 = vsub.f32 1.0, %v1385
  %v1387 = vmul.f32 %v1384, %v1386
  %v1388 = vadd.f32 %v1384, %v1387
  %vm1389 = vweird.f32 %v1384
  %v1390 = vsel %vm1389, %v1384, %v1388
  %v1391 = vmul.f32 %v1383, %v1390
  %v1392 = vsub.f32 %v1373, %v1391
  %v1393 = vmul.f32 %v1392, %v1392
  %v1394 = vsel %vm1376, %v1393, 0.0
  %v1395 = vrot.slane %v1394, 4
  %v1396 = vadd.f32 %v1394, %v1395
  %v1397 = vrot.slane %v1396, 2
  %v1398 = vadd.f32 %v1396, %v1397
  %v1399 = vrot.slane %v1398, 1
  %v1400 = vadd.f32 %v1398, %v1399
  %v1401 = vmul.f32 %v1400, %v1390
  %v1402 = vadd.f32 %v1401, 1e-05
  %v1403 = vrsqrt.pop %v1402
  %v1404 = vmul.f32 %v1403, %v1402
  %v1405 = vmul.f32 %v1404, %v1403
  %v1406 = vmul.f32 0.5, %v1405
  %v1407 = vsub.f32 1.5, %v1406
  %v1408 = vmul.f32 %v1403, %v1407
  %vm1409 = vweird.f32 %v1402
  %vm1410 = vweird.f32 %v1403
  %vm1411 = vmor %vm1409, %vm1410
  %v1412 = vsel %vm1411, %v1403, %v1408
  %v1413 = vmul.f32 %v1392, %v1412
  %v1415 = vperm.slane %v1374, 0
  %1416 = vrot.lane.b32.xlu0 %v1415, 96
  %v1417 = vpop.permute.xlu0 %1416
  %v1419 = vmul.f32 %v1413, %v1417
  %v1421 = vperm.slane %v1375, 0
  %1422 = vrot.lane.b32.xlu0 %v1421, 96
  %v1423 = vpop.permute.xlu0 %1422
  %v1425 = vadd.f32 %v1419, %v1423
  %v1426 = vld [vmem:[%s43] sm:$0xff]
  %v1427 = vld [vmem:[%s43 + $0x8] sm:$0xff]
  %v1428 = vld [vmem:[%s43 + $0x10] sm:$0xff]
  %v1429 = vld [vmem:[%s43 + $0x18] sm:$0xff]
  %v1430 = vld [vmem:[%s45] sm:$0x1]
  %v1432 = vperm.slane %v1430, 0
  %1435 = vrot.lane.b32.xlu0 %v1425, 32
  %v1436 = vpop.permute.xlu0 %1435
  %v1437 = vsel %vm374, %v1436, 0
  %1439 = vmatpush.msra.mxu0 0.0
  %1440 = vmatpush.msra.mxu0 0.0
  %1441 = vmatpush.msra.mxu0 0.0
  %1442 = vmatpush.msra.mxu0 0.0
  %1443 = vmatpush.msra.mxu0 0.0
  %1444 = vmatpush.msra.mxu0 0.0
  %1445 = vmatpush.msra.mxu0 0.0
  %1446 = vmatpush.msra.mxu0 0.0
  %1447 = vmatpush.msra.mxu0 0.0
  %1448 = vmatpush.msra.mxu0 0.0
  %1449 = vmatpush.msra.mxu0 0.0
  %1450 = vmatpush.msra.mxu0 0.0
  %1451 = vmatpush.msra.mxu0 %v1429
  %1452 = vmatpush.msra.mxu0 %v1428
  %1453 = vmatpush.msra.mxu0 %v1427
  %1454 = vmatpush.msra.mxu0 %v1426
  %1455 = vmatmul.f32.gmra.mxu0 %v1437
  %v1456 = vpop.f32.mrf.mxu0
  %v1457 = vadd.f32 %v1432, %v1456
  %1458 = vdwg.mxu0
  %v1459 = vmax.f32 %v1457, 0.0
  %v1460 = vld [vmem:[%s47] sm:$0x1]
  %v1461 = vld [vmem:[%s49] sm:$0x1]
  %vm1462 = vcmask 523264
  %v1463 = vsel %vm1462, %v1459, 0.0
  %v1464 = vrot.slane %v1463, 4
  %v1465 = vadd.f32 %v1463, %v1464
  %v1466 = vrot.slane %v1465, 2
  %v1467 = vadd.f32 %v1465, %v1466
  %v1468 = vrot.slane %v1467, 1
  %v1469 = vadd.f32 %v1467, %v1468
  %v1470 = vmul.f32 %v1469, %v1390
  %v1471 = vsub.f32 %v1459, %v1470
  %v1472 = vmul.f32 %v1471, %v1471
  %v1473 = vsel %vm1462, %v1472, 0.0
  %v1474 = vrot.slane %v1473, 4
  %v1475 = vadd.f32 %v1473, %v1474
  %v1476 = vrot.slane %v1475, 2
  %v1477 = vadd.f32 %v1475, %v1476
  %v1478 = vrot.slane %v1477, 1
  %v1479 = vadd.f32 %v1477, %v1478
  %v1480 = vmul.f32 %v1479, %v1390
  %v1481 = vadd.f32 %v1480, 1e-05
  %v1482 = vrsqrt.pop %v1481
  %v1483 = vmul.f32 %v1482, %v1481
  %v1484 = vmul.f32 %v1483, %v1482
  %v1485 = vmul.f32 0.5, %v1484
  %v1486 = vsub.f32 1.5, %v1485
  %v1487 = vmul.f32 %v1482, %v1486
  %vm1488 = vweird.f32 %v1481
  %vm1489 = vweird.f32 %v1482
  %vm1490 = vmor %vm1488, %vm1489
  %v1491 = vsel %vm1490, %v1482, %v1487
  %v1492 = vmul.f32 %v1471, %v1491
  %v1494 = vperm.slane %v1460, 0
  %v1496 = vmul.f32 %v1492, %v1494
  %v1498 = vperm.slane %v1461, 0
  %v1500 = vadd.f32 %v1496, %v1498
  %v1501 = vld [vmem:[%s51] sm:$0xff]
  %v1502 = vld [vmem:[%s51 + $0x8] sm:$0xff]
  %v1503 = vld [vmem:[%s51 + $0x10] sm:$0xff]
  %v1504 = vld [vmem:[%s51 + $0x18] sm:$0xff]
  %v1505 = vld [vmem:[%s51 + $0x20] sm:$0xff]
  %v1506 = vld [vmem:[%s51 + $0x28] sm:$0xff]
  %v1507 = vld [vmem:[%s51 + $0x30] sm:$0xff]
  %v1508 = vld [vmem:[%s51 + $0x38] sm:$0xff]
  %v1509 = vld [vmem:[%s53] sm:$0x1]
  %v1511 = vperm.slane %v1509, 0
  %v1514 = vsel %vm1462, %v1500, 0
  %1516 = vmatpush.msra.mxu0 0.0
  %1517 = vmatpush.msra.mxu0 0.0
  %1518 = vmatpush.msra.mxu0 0.0
  %1519 = vmatpush.msra.mxu0 0.0
  %1520 = vmatpush.msra.mxu0 0.0
  %1521 = vmatpush.msra.mxu0 0.0
  %1522 = vmatpush.msra.mxu0 0.0
  %1523 = vmatpush.msra.mxu0 0.0
  %1524 = vmatpush.msra.mxu0 %v1508
  %1525 = vmatpush.msra.mxu0 %v1507
  %1526 = vmatpush.msra.mxu0 %v1506
  %1527 = vmatpush.msra.mxu0 %v1505
  %1528 = vmatpush.msra.mxu0 %v1504
  %1529 = vmatpush.msra.mxu0 %v1503
  %1530 = vmatpush.msra.mxu0 %v1502
  %1531 = vmatpush.msra.mxu0 %v1501
  %1532 = vmatmul.f32.gmra.mxu0 %v1514
  %v1533 = vpop.f32.mrf.mxu0
  %v1534 = vadd.f32 %v1511, %v1533
  %1535 = vdwg.mxu0
  %v1536 = vmax.f32 %v1534, 0.0
  %v1537 = vld [vmem:[%s55] sm:$0xff]
  %v1538 = vld [vmem:[%s55 + $0x8] sm:$0xff]
  %v1539 = vld [vmem:[%s55 + $0x10] sm:$0xff]
  %v1540 = vld [vmem:[%s55 + $0x18] sm:$0xff]
  %v1541 = vld [vmem:[%s55 + $0x20] sm:$0xff]
  %v1542 = vld [vmem:[%s55 + $0x28] sm:$0xff]
  %v1543 = vld [vmem:[%s55 + $0x30] sm:$0xff]
  %v1544 = vld [vmem:[%s55 + $0x38] sm:$0xff]
  %v1545 = vld [vmem:[%s57] sm:$0x1]
  %v1547 = vperm.slane %v1545, 0
  %v1550 = vsel %vm1462, %v1536, 0
  %1552 = vmatpush.msra.mxu0 0.0
  %1553 = vmatpush.msra.mxu0 0.0
  %1554 = vmatpush.msra.mxu0 0.0
  %1555 = vmatpush.msra.mxu0 0.0
  %1556 = vmatpush.msra.mxu0 0.0
  %1557 = vmatpush.msra.mxu0 0.0
  %1558 = vmatpush.msra.mxu0 0.0
  %1559 = vmatpush.msra.mxu0 0.0
  %1560 = vmatpush.msra.mxu0 %v1544
  %1561 = vmatpush.msra.mxu0 %v1543
  %1562 = vmatpush.msra.mxu0 %v1542
  %1563 = vmatpush.msra.mxu0 %v1541
  %1564 = vmatpush.msra.mxu0 %v1540
  %1565 = vmatpush.msra.mxu0 %v1539
  %1566 = vmatpush.msra.mxu0 %v1538
  %1567 = vmatpush.msra.mxu0 %v1537
  %1568 = vmatmul.f32.gmra.mxu0 %v1550
  %v1569 = vpop.f32.mrf.mxu0
  %v1570 = vadd.f32 %v1547, %v1569
  %1571 = vdwg.mxu0
  %v1572 = vxor.u32 %v1570, 2147483648
  %v1573 = vmul.f32 %v1572, 1.442695
  %v1574 = vpow.pop %v1573
  %v1575 = vadd.f32 %v1574, 1.0
  %v1576 = vrcp.pop %v1575
  %v1577 = vmul.f32 %v1575, %v1576
  %v1578 = vsub.f32 1.0, %v1577
  %v1579 = vmul.f32 %v1576, %v1578
  %v1580 = vadd.f32 %v1576, %v1579
  %vm1581 = vweird.f32 %v1575
  %vm1582 = vweird.f32 %v1576
  %vm1583 = vmor %vm1581, %vm1582
  %v1584 = vsel %vm1583, %v1576, %v1580
  %v1585 = vand.u32 2147483647, %v1575
  %vm1586 = vcmp.eq.f32.partialorder %v1585, 8.507059e+37
  %v1587 = vand.u32 %v1575, 2147483648
  %v1588 = vor.u32 1.1754944e-38, %v1587
  %v1589 = vsel %vm1586, %v1588, %v1584
  %v1590 = vmul.f32 1.0, %v1589
  %vm1591 = vcmask 15360
  %1592 = vst.msk [vmem:[%s59] sm:$0xff] %vm1591, %v1590
  // Predicated region
  $region118: #{representation_forward.1} parent=0 // pred_check
    _
  $region119: #{representation_forward.1} parent=0 // pred_check_branch
    %1594 = sbr.rel (0) target = $region121
  $region120: #{representation_forward.1} parent=0 // pred_region
    _
  $region121: #{representation_forward.1} parent=0 // pred_fallthru
    _
  // Predicated region
  $region122: #{representation_forward.1} parent=0 // pred_check
    _
  $region123: #{representation_forward.1} parent=0 // pred_check_branch
    %1596 = sbr.rel (0) target = $region125
  $region124: #{representation_forward.1} parent=0 // pred_region
    _
  $region125: #{representation_forward.1} parent=0 // pred_fallthru
    _

</llo_original>
